<compile_context>
chip_gen: v5e
topology: v5e:2x2
jax: 0.10.0
libtpu: 0.0.40
codegen_flags: <defaults>
</compile_context>

<pallas_src>
import functools

import numpy as np

import jax
import jax.numpy as jnp
from jax.experimental import pallas as pl
from jax.experimental.pallas import tpu as pltpu


def padding_to_be_divisible_by_n(input_size: int, divisor: int) -> int:
    if input_size % divisor == 0:
        return 0
    return divisor - input_size % divisor


# ----------------------------- Pallas fused kernel ----------------------------- #

def _fused_layers_kernel(*refs, meta):
    """refs = [x_ref, (W, b[, Wo, bo]) per layer ..., o_ref].

    x_ref : (F_in, Nb)   features on sublanes, batch samples on lanes
    W     : (F_out, F_in) dense-packed conv (+ 'same' pad [+ 2x upsample]) matrix
    b     : (F_out, 1)
    Wo/bo : odd-output-row variants for layers followed by MaxPool1d(2)
    o_ref : (F_last, Nb)
    """
    x_ref, o_ref = refs[0], refs[-1]
    w_refs = refs[1:-1]
    h = x_ref[...]
    i = 0
    for has_pool, act in meta:                 # static python loop -> fully unrolled
        w = w_refs[i][...]
        b = w_refs[i + 1][...]
        i += 2
        z = jnp.dot(w, h, preferred_element_type=jnp.float32) + b
        if has_pool:
            # MaxPool1d(2): even/odd output positions were split into two row sets at
            # pack time; elementwise max == pool (valid because LeakyReLU is monotone).
            wo = w_refs[i][...]
            bo = w_refs[i + 1][...]
            i += 2
            zo = jnp.dot(wo, h, preferred_element_type=jnp.float32) + bo
            z = jnp.maximum(z, zo)
        if act == "leaky_relu":
            h = jnp.where(z > 0, z, 0.01 * z)          # nn.LeakyReLU default slope
        else:                                          # sigmoid, EUP exp + EUP recip
            h = pl.reciprocal(1.0 + jnp.exp(-z), approx=True)
    o_ref[...] = h.astype(o_ref.dtype)


def _fused_layers_call(x_feat, layers, *, max_batch_block=512):
    """Run a whole stack of packed layers in ONE pallas_call.

    x_feat: (F_in, N) f32, batch on the lane axis.  Returns (F_out, N) f32.
    """
    f_in, n = x_feat.shape
    f_out = layers[-1]["W"].shape[0]

    if n <= max_batch_block:
        nb, n_pad = n, n                      # one grid step over the whole batch
    else:
        # Large-N deployment path: lane-dense 512-wide batch blocks (multiple of 128),
        # "parallel" grid so both v7x TensorCores get work; <2 MiB of VMEM per block.
        nb = max_batch_block
        n_pad = -(-n // nb) * nb
        x_feat = jnp.pad(x_feat, ((0, 0), (0, n_pad - n)))

    operands = [x_feat]
    in_specs = [pl.BlockSpec((f_in, nb), lambda j: (0, j))]
    meta = []
    for lyr in layers:
        operands += [lyr["W"], lyr["b"]]
        in_specs += [pl.BlockSpec(lyr["W"].shape, lambda j: (0, 0)),
                     pl.BlockSpec(lyr["b"].shape, lambda j: (0, 0))]
        has_pool = lyr["Wo"] is not None
        if has_pool:
            operands += [lyr["Wo"], lyr["bo"]]
            in_specs += [pl.BlockSpec(lyr["Wo"].shape, lambda j: (0, 0)),
                         pl.BlockSpec(lyr["bo"].shape, lambda j: (0, 0))]
        meta.append((has_pool, lyr["act"]))

    kernel = functools.partial(_fused_layers_kernel, meta=tuple(meta))
    out = pl.pallas_call(
        kernel,
        out_shape=jax.ShapeDtypeStruct((f_out, n_pad), jnp.float32),
        grid=(n_pad // nb,),
        in_specs=in_specs,
        out_specs=pl.BlockSpec((f_out, nb), lambda j: (0, j)),
        compiler_params=pltpu.CompilerParams(
            dimension_semantics=("parallel",)),
    )(*operands)
    return out[:, :n]


# --------------------------- host-side dense packing --------------------------- #

def _conv_to_dense(w, b, l_in, upsample):
    """Pack Conv1d(padding='same') [optionally preceded by 2x nearest Upsample] into a
    dense matrix acting on the flattened (Cin*Lin,) feature vector.

    w: (Cout, Cin, K), b: (Cout,) numpy.  Returns W_big, b_big (1-D), Lout.
    """
    c_out, c_in, k = w.shape
    pad = (k - 1) // 2                         # odd kernels (7/9/11), torch 'same'
    l_eff = 2 * l_in if upsample else l_in
    l_out = l_eff
    big = np.zeros((c_out * l_out, c_in * l_in), dtype=np.float32)
    cols = np.arange(c_in) * l_in
    for co in range(c_out):
        for l in range(l_out):
            row = co * l_out + l
            for kk in range(k):
                j = l + kk - pad               # tap position in (upsampled) input
                if j < 0 or j >= l_eff:
                    continue                   # 'same' zero padding
                m = j // 2 if upsample else j  # pre-upsample column (nearest-neighbour)
                big[row, cols + m] += w[co, :, kk]
    b_big = np.repeat(np.asarray(b, np.float32), l_out)
    return big, b_big, l_out


def _pool_split(w_big, b_big, c_out, l_out):
    """Split rows into even/odd output positions for a following MaxPool1d(2)."""
    l_p = l_out // 2
    idx_e = np.array([co * l_out + 2 * l for co in range(c_out) for l in range(l_p)])
    idx_o = idx_e + 1
    return w_big[idx_e], b_big[idx_e], w_big[idx_o], b_big[idx_o], l_p


# ------------------------------ model definition ------------------------------- #

def init_conv1d_model_params(key, n_channels, num_poolings):
    """Random params mirroring Conv1DModel.__init__ (PyTorch (Cout, Cin, K) layout)."""
    padded = n_channels + padding_to_be_divisible_by_n(n_channels, 2 ** num_poolings)

    enc_specs = [(11, 1, padded // 2, "leaky_relu", True)]
    for i in range(1, num_poolings):
        enc_specs.append((11, padded // 2 ** i, padded // 2 ** (i + 1),
                          "leaky_relu", True))
    enc_specs.append((9, padded // 2 ** num_poolings,
                      padded // 2 ** (num_poolings + 1), "leaky_relu", False))
    enc_specs.append((7, padded // 2 ** (num_poolings + 1), 1, "sigmoid", False))

    dec_specs = [(7, 1, padded // 2 ** (num_poolings + 1), "leaky_relu", False),
                 (9, padded // 2 ** (num_poolings + 1), padded // 2 ** num_poolings,
                  "leaky_relu", False)]
    for i in range(num_poolings, 1, -1):
        dec_specs.append((11, padded // 2 ** i, padded // 2 ** (i - 1),
                          "leaky_relu", True))
    dec_specs.append((11, padded // 2, 1, "sigmoid", True))

    def make(key, specs, flag_name):
        layers = []
        for (k, c_in, c_out, act, flag) in specs:
            key, wk, bk = jax.random.split(key, 3)
            bound = 1.0 / (c_in * k) ** 0.5    # PyTorch Conv1d default init range
            w = jax.random.uniform(wk, (c_out, c_in, k), jnp.float32, -bound, bound)
            b = jax.random.uniform(bk, (c_out,), jnp.float32, -bound, bound)
            layers.append({"w": w, "b": b, "act": act, flag_name: flag})
        return key, layers

    key, enc = make(key, enc_specs, "pool")
    key, dec = make(key, dec_specs, "up")
    return {"padded_channels": padded, "enc_convs": enc, "dec_convs": dec}


def pack_dense_layers(params):
    """One-time host-side packing of every conv layer into dense matrices."""
    padded = params["padded_channels"]

    enc_layers, length = [], padded
    for lyr in params["enc_convs"]:
        w = np.asarray(lyr["w"])
        b = np.asarray(lyr["b"])
        w_big, b_big, l_out = _conv_to_dense(w, b, length, upsample=False)
        if lyr["pool"]:
            assert lyr["act"] == "leaky_relu"  # monotone -> pool/activation commute
            w_e, b_e, w_o, b_o, l_out = _pool_split(w_big, b_big, w.shape[0], l_out)
            enc_layers.append(dict(W=jnp.asarray(w_e), b=jnp.asarray(b_e)[:, None],
                                   Wo=jnp.asarray(w_o), bo=jnp.asarray(b_o)[:, None],
                                   act=lyr["act"]))
        else:
            enc_layers.append(dict(W=jnp.asarray(w_big), b=jnp.asarray(b_big)[:, None],
                                   Wo=None, bo=None, act=lyr["act"]))
        length = l_out

    dec_layers = []
    for lyr in params["dec_convs"]:
        w = np.asarray(lyr["w"])
        b = np.asarray(lyr["b"])
        w_big, b_big, l_out = _conv_to_dense(w, b, length, upsample=lyr["up"])
        dec_layers.append(dict(W=jnp.asarray(w_big), b=jnp.asarray(b_big)[:, None],
                               Wo=None, bo=None, act=lyr["act"]))
        length = l_out

    return {"enc_layers": enc_layers, "dec_layers": dec_layers}


def conv1d_model_forward(x, packed, n_channels, padded_channels):
    """encoder -> decoder (Conv1DModel.forward) on pre-flattened (N, 1, C) input."""
    if x.ndim != 3 or x.shape[1] != 1:
        raise ValueError("Input is expected in format (Batch, 1, Channels). "
                         "Shape was instead: " + str(x.shape))
    n = x.shape[0]
    # Conv1DEncoder.forward: zero-pad the channel axis up to padded_channels.
    h = jnp.pad(x, ((0, 0), (0, 0), (0, padded_channels - x.shape[2])))
    feat = h[:, 0, :].T                                       # (padded_channels, N)
    latent = _fused_layers_call(feat, packed["enc_layers"])   # (L_latent, N)
    dec = _fused_layers_call(latent, packed["dec_layers"])    # (padded_channels, N)
    out = dec.T.reshape(n, 1, padded_channels)[:, :, :n_channels]
    # TODO(synk): flatten_spacial_dims / unflatten_and_split_apart_batches are defined
    # elsewhere in hypercomp (spatial<->batch reshuffles); inputs here are pre-flattened.
    return out


# ------------------------- pure-JAX reference (checking) ------------------------ #

def _leaky_relu(x):
    return jnp.where(x > 0, x, 0.01 * x)


def _conv1d_same_ref(x, w, b):
    pad = (w.shape[-1] - 1) // 2
    y = jax.lax.conv_general_dilated(
        x, w, window_strides=(1,), padding=[(pad, pad)],
        dimension_numbers=("NCH", "OIH", "NCH"),
        precision=jax.lax.Precision.HIGHEST)
    return y + b[None, :, None]


def reference_forward(x, params, n_channels):
    padded = params["padded_channels"]
    h = jnp.pad(x, ((0, 0), (0, 0), (0, padded - x.shape[2])))
    for lyr in params["enc_convs"]:
        h = _conv1d_same_ref(h, lyr["w"], lyr["b"])
        h = _leaky_relu(h) if lyr["act"] == "leaky_relu" else jax.nn.sigmoid(h)
        if lyr["pool"]:
            n_, c_, l_ = h.shape
            h = jnp.max(h.reshape(n_, c_, l_ // 2, 2), axis=-1)
    for lyr in params["dec_convs"]:
        if lyr["up"]:
            h = jnp.repeat(h, 2, axis=2)
        h = _conv1d_same_ref(h, lyr["w"], lyr["b"])
        h = _leaky_relu(h) if lyr["act"] == "leaky_relu" else jax.nn.sigmoid(h)
    return h[:, :, :n_channels]


# -------------------------------------- main ------------------------------------ #

if __name__ == "__main__":
    n_channels = 30
    num_poolings = 2
    n = 16                         # flattened batch * spatial samples

    key = jax.random.PRNGKey(0)
    key, pkey, xkey = jax.random.split(key, 3)

    params = init_conv1d_model_params(pkey, n_channels, num_poolings)
    packed = pack_dense_layers(params)

    x = jax.random.uniform(xkey, (n, 1, n_channels), jnp.float32)

    out = conv1d_model_forward(x, packed, n_channels, params["padded_channels"])
    out = jax.block_until_ready(out)
    assert out.shape == (n, 1, n_channels), out.shape

    # Loose tolerance only because the in-kernel sigmoid uses the EUP approximate
    # reciprocal; structural errors (wrong banding / pooling / upsampling) are far larger.
    ref = jax.block_until_ready(reference_forward(x, params, n_channels))
    np.testing.assert_allclose(np.asarray(out), np.asarray(ref), rtol=0.0, atol=5e-2)

    print("KERNEL_OK")
</pallas_src>

<mosaic_0001>
module attributes {stable_mosaic.version = 11 : i64} {
  func.func @_fused_layers_kernel(%arg0: i32, %arg1: memref<32x16xf32, #tpu.memory_space<vmem>>, %arg2: memref<256x32xf32, #tpu.memory_space<vmem>>, %arg3: memref<256x1xf32, #tpu.memory_space<vmem>>, %arg4: memref<256x32xf32, #tpu.memory_space<vmem>>, %arg5: memref<256x1xf32, #tpu.memory_space<vmem>>, %arg6: memref<64x256xf32, #tpu.memory_space<vmem>>, %arg7: memref<64x1xf32, #tpu.memory_space<vmem>>, %arg8: memref<64x256xf32, #tpu.memory_space<vmem>>, %arg9: memref<64x1xf32, #tpu.memory_space<vmem>>, %arg10: memref<32x64xf32, #tpu.memory_space<vmem>>, %arg11: memref<32x1xf32, #tpu.memory_space<vmem>>, %arg12: memref<8x32xf32, #tpu.memory_space<vmem>>, %arg13: memref<8x1xf32, #tpu.memory_space<vmem>>, %arg14: memref<8x16xf32, #tpu.memory_space<vmem>>) attributes {dimension_semantics = [#tpu.dimension_semantics<parallel>], iteration_bounds = array<i64: 1>, scalar_prefetch = 0 : i64, scratch_operands = 0 : i64, tpu.core_type = #tpu.core_type<tc>, window_params = [{transform_indices = @transform_0, window_bounds = array<i64: 32, 16>}, {pipeline_mode = #tpu.pipeline_mode<synchronous>, transform_indices = @transform_1, window_bounds = array<i64: 256, 32>}, {pipeline_mode = #tpu.pipeline_mode<synchronous>, transform_indices = @transform_2, window_bounds = array<i64: 256, 1>}, {pipeline_mode = #tpu.pipeline_mode<synchronous>, transform_indices = @transform_3, window_bounds = array<i64: 256, 32>}, {pipeline_mode = #tpu.pipeline_mode<synchronous>, transform_indices = @transform_4, window_bounds = array<i64: 256, 1>}, {pipeline_mode = #tpu.pipeline_mode<synchronous>, transform_indices = @transform_5, window_bounds = array<i64: 64, 256>}, {pipeline_mode = #tpu.pipeline_mode<synchronous>, transform_indices = @transform_6, window_bounds = array<i64: 64, 1>}, {pipeline_mode = #tpu.pipeline_mode<synchronous>, transform_indices = @transform_7, window_bounds = array<i64: 64, 256>}, {pipeline_mode = #tpu.pipeline_mode<synchronous>, transform_indices = @transform_8, window_bounds = array<i64: 64, 1>}, {pipeline_mode = #tpu.pipeline_mode<synchronous>, transform_indices = @transform_9, window_bounds = array<i64: 32, 64>}, {pipeline_mode = #tpu.pipeline_mode<synchronous>, transform_indices = @transform_10, window_bounds = array<i64: 32, 1>}, {pipeline_mode = #tpu.pipeline_mode<synchronous>, transform_indices = @transform_11, window_bounds = array<i64: 8, 32>}, {pipeline_mode = #tpu.pipeline_mode<synchronous>, transform_indices = @transform_12, window_bounds = array<i64: 8, 1>}, {transform_indices = @transform_13, window_bounds = array<i64: 8, 16>}]} {
    %c0 = arith.constant 0 : index
    %c0_0 = arith.constant 0 : index
    %0 = vector.load %arg1[%c0, %c0_0] : memref<32x16xf32, #tpu.memory_space<vmem>>, vector<32x16xf32>
    %c0_1 = arith.constant 0 : index
    %c0_2 = arith.constant 0 : index
    %1 = vector.load %arg2[%c0_1, %c0_2] : memref<256x32xf32, #tpu.memory_space<vmem>>, vector<256x32xf32>
    %c0_3 = arith.constant 0 : index
    %c0_4 = arith.constant 0 : index
    %2 = vector.load %arg3[%c0_3, %c0_4] : memref<256x1xf32, #tpu.memory_space<vmem>>, vector<256x1xf32>
    %cst = arith.constant dense<0.000000e+00> : vector<256x16xf32>
    %3 = tpu.matmul %1, %0, %cst {dimension_numbers = #tpu.dot_dimension_numbers<[1], [0], [0], [1], [0, 0, 1, 1], [], []>} : vector<256x32xf32>, vector<32x16xf32>, vector<256x16xf32> -> vector<256x16xf32>
    %4 = vector.broadcast %2 : vector<256x1xf32> to vector<256x16xf32>
    %5 = arith.addf %3, %4 : vector<256x16xf32>
    %c0_5 = arith.constant 0 : index
    %c0_6 = arith.constant 0 : index
    %6 = vector.load %arg4[%c0_5, %c0_6] : memref<256x32xf32, #tpu.memory_space<vmem>>, vector<256x32xf32>
    %c0_7 = arith.constant 0 : index
    %c0_8 = arith.constant 0 : index
    %7 = vector.load %arg5[%c0_7, %c0_8] : memref<256x1xf32, #tpu.memory_space<vmem>>, vector<256x1xf32>
    %cst_9 = arith.constant dense<0.000000e+00> : vector<256x16xf32>
    %8 = tpu.matmul %6, %0, %cst_9 {dimension_numbers = #tpu.dot_dimension_numbers<[1], [0], [0], [1], [0, 0, 1, 1], [], []>} : vector<256x32xf32>, vector<32x16xf32>, vector<256x16xf32> -> vector<256x16xf32>
    %9 = vector.broadcast %7 : vector<256x1xf32> to vector<256x16xf32>
    %10 = arith.addf %8, %9 : vector<256x16xf32>
    %11 = arith.maximumf %5, %10 : vector<256x16xf32>
    %cst_10 = arith.constant 0.000000e+00 : f32
    %12 = vector.broadcast %cst_10 : f32 to vector<256x16xf32>
    %13 = arith.cmpf ogt, %11, %12 : vector<256x16xf32>
    %cst_11 = arith.constant 0.00999999977 : f32
    %14 = vector.broadcast %cst_11 : f32 to vector<256x16xf32>
    %15 = arith.mulf %14, %11 : vector<256x16xf32>
    %16 = arith.select %13, %11, %15 : vector<256x16xi1>, vector<256x16xf32>
    %c0_12 = arith.constant 0 : index
    %c0_13 = arith.constant 0 : index
    %17 = vector.load %arg6[%c0_12, %c0_13] : memref<64x256xf32, #tpu.memory_space<vmem>>, vector<64x256xf32>
    %c0_14 = arith.constant 0 : index
    %c0_15 = arith.constant 0 : index
    %18 = vector.load %arg7[%c0_14, %c0_15] : memref<64x1xf32, #tpu.memory_space<vmem>>, vector<64x1xf32>
    %cst_16 = arith.constant dense<0.000000e+00> : vector<64x16xf32>
    %19 = tpu.matmul %17, %16, %cst_16 {dimension_numbers = #tpu.dot_dimension_numbers<[1], [0], [0], [1], [0, 0, 1, 1], [], []>} : vector<64x256xf32>, vector<256x16xf32>, vector<64x16xf32> -> vector<64x16xf32>
    %20 = vector.broadcast %18 : vector<64x1xf32> to vector<64x16xf32>
    %21 = arith.addf %19, %20 : vector<64x16xf32>
    %c0_17 = arith.constant 0 : index
    %c0_18 = arith.constant 0 : index
    %22 = vector.load %arg8[%c0_17, %c0_18] : memref<64x256xf32, #tpu.memory_space<vmem>>, vector<64x256xf32>
    %c0_19 = arith.constant 0 : index
    %c0_20 = arith.constant 0 : index
    %23 = vector.load %arg9[%c0_19, %c0_20] : memref<64x1xf32, #tpu.memory_space<vmem>>, vector<64x1xf32>
    %cst_21 = arith.constant dense<0.000000e+00> : vector<64x16xf32>
    %24 = tpu.matmul %22, %16, %cst_21 {dimension_numbers = #tpu.dot_dimension_numbers<[1], [0], [0], [1], [0, 0, 1, 1], [], []>} : vector<64x256xf32>, vector<256x16xf32>, vector<64x16xf32> -> vector<64x16xf32>
    %25 = vector.broadcast %23 : vector<64x1xf32> to vector<64x16xf32>
    %26 = arith.addf %24, %25 : vector<64x16xf32>
    %27 = arith.maximumf %21, %26 : vector<64x16xf32>
    %cst_22 = arith.constant 0.000000e+00 : f32
    %28 = vector.broadcast %cst_22 : f32 to vector<64x16xf32>
    %29 = arith.cmpf ogt, %27, %28 : vector<64x16xf32>
    %cst_23 = arith.constant 0.00999999977 : f32
    %30 = vector.broadcast %cst_23 : f32 to vector<64x16xf32>
    %31 = arith.mulf %30, %27 : vector<64x16xf32>
    %32 = arith.select %29, %27, %31 : vector<64x16xi1>, vector<64x16xf32>
    %c0_24 = arith.constant 0 : index
    %c0_25 = arith.constant 0 : index
    %33 = vector.load %arg10[%c0_24, %c0_25] : memref<32x64xf32, #tpu.memory_space<vmem>>, vector<32x64xf32>
    %c0_26 = arith.constant 0 : index
    %c0_27 = arith.constant 0 : index
    %34 = vector.load %arg11[%c0_26, %c0_27] : memref<32x1xf32, #tpu.memory_space<vmem>>, vector<32x1xf32>
    %cst_28 = arith.constant dense<0.000000e+00> : vector<32x16xf32>
    %35 = tpu.matmul %33, %32, %cst_28 {dimension_numbers = #tpu.dot_dimension_numbers<[1], [0], [0], [1], [0, 0, 1, 1], [], []>} : vector<32x64xf32>, vector<64x16xf32>, vector<32x16xf32> -> vector<32x16xf32>
    %36 = vector.broadcast %34 : vector<32x1xf32> to vector<32x16xf32>
    %37 = arith.addf %35, %36 : vector<32x16xf32>
    %cst_29 = arith.constant 0.000000e+00 : f32
    %38 = vector.broadcast %cst_29 : f32 to vector<32x16xf32>
    %39 = arith.cmpf ogt, %37, %38 : vector<32x16xf32>
    %cst_30 = arith.constant 0.00999999977 : f32
    %40 = vector.broadcast %cst_30 : f32 to vector<32x16xf32>
    %41 = arith.mulf %40, %37 : vector<32x16xf32>
    %42 = arith.select %39, %37, %41 : vector<32x16xi1>, vector<32x16xf32>
    %c0_31 = arith.constant 0 : index
    %c0_32 = arith.constant 0 : index
    %43 = vector.load %arg12[%c0_31, %c0_32] : memref<8x32xf32, #tpu.memory_space<vmem>>, vector<8x32xf32>
    %c0_33 = arith.constant 0 : index
    %c0_34 = arith.constant 0 : index
    %44 = vector.load %arg13[%c0_33, %c0_34] : memref<8x1xf32, #tpu.memory_space<vmem>>, vector<8x1xf32>
    %cst_35 = arith.constant dense<0.000000e+00> : vector<8x16xf32>
    %45 = tpu.matmul %43, %42, %cst_35 {dimension_numbers = #tpu.dot_dimension_numbers<[1], [0], [0], [1], [0, 0, 1, 1], [], []>} : vector<8x32xf32>, vector<32x16xf32>, vector<8x16xf32> -> vector<8x16xf32>
    %46 = vector.broadcast %44 : vector<8x1xf32> to vector<8x16xf32>
    %47 = arith.addf %45, %46 : vector<8x16xf32>
    %cst_36 = arith.constant 0.000000e+00 : f32
    %48 = vector.broadcast %cst_36 : f32 to vector<8x16xf32>
    %49 = arith.subf %48, %47 : vector<8x16xf32>
    %50 = math.exp %49 : vector<8x16xf32>
    %cst_37 = arith.constant 1.000000e+00 : f32
    %51 = vector.broadcast %cst_37 : f32 to vector<8x16xf32>
    %52 = arith.addf %51, %50 : vector<8x16xf32>
    %53 = tpu.reciprocal %52 {approx = true} : vector<8x16xf32> -> vector<8x16xf32>
    %c0_38 = arith.constant 0 : index
    %c0_39 = arith.constant 0 : index
    %54 = vector.load %arg14[%c0_38, %c0_39] : memref<8x16xf32, #tpu.memory_space<vmem>>, vector<8x16xf32>
    tpu.vector_store %arg14[%c0_38, %c0_39], %53 {strides = array<i32>} : memref<8x16xf32, #tpu.memory_space<vmem>>, vector<8x16xf32>,
    return
  }
  func.func @transform_0(%arg0: i32) -> (i32, i32) {
    %c0_i32 = arith.constant 0 : i32
    %c0_i32_0 = arith.constant 0 : i32
    return %c0_i32, %arg0 : i32, i32
  }
  func.func @transform_1(%arg0: i32) -> (i32, i32) {
    %c0_i32 = arith.constant 0 : i32
    %c0_i32_0 = arith.constant 0 : i32
    %c0_i32_1 = arith.constant 0 : i32
    return %c0_i32, %c0_i32_0 : i32, i32
  }
  func.func @transform_2(%arg0: i32) -> (i32, i32) {
    %c0_i32 = arith.constant 0 : i32
    %c0_i32_0 = arith.constant 0 : i32
    %c0_i32_1 = arith.constant 0 : i32
    return %c0_i32, %c0_i32_0 : i32, i32
  }
  func.func @transform_3(%arg0: i32) -> (i32, i32) {
    %c0_i32 = arith.constant 0 : i32
    %c0_i32_0 = arith.constant 0 : i32
    %c0_i32_1 = arith.constant 0 : i32
    return %c0_i32, %c0_i32_0 : i32, i32
  }
  func.func @transform_4(%arg0: i32) -> (i32, i32) {
    %c0_i32 = arith.constant 0 : i32
    %c0_i32_0 = arith.constant 0 : i32
    %c0_i32_1 = arith.constant 0 : i32
    return %c0_i32, %c0_i32_0 : i32, i32
  }
  func.func @transform_5(%arg0: i32) -> (i32, i32) {
    %c0_i32 = arith.constant 0 : i32
    %c0_i32_0 = arith.constant 0 : i32
    %c0_i32_1 = arith.constant 0 : i32
    return %c0_i32, %c0_i32_0 : i32, i32
  }
  func.func @transform_6(%arg0: i32) -> (i32, i32) {
    %c0_i32 = arith.constant 0 : i32
    %c0_i32_0 = arith.constant 0 : i32
    %c0_i32_1 = arith.constant 0 : i32
    return %c0_i32, %c0_i32_0 : i32, i32
  }
  func.func @transform_7(%arg0: i32) -> (i32, i32) {
    %c0_i32 = arith.constant 0 : i32
    %c0_i32_0 = arith.constant 0 : i32
    %c0_i32_1 = arith.constant 0 : i32
    return %c0_i32, %c0_i32_0 : i32, i32
  }
  func.func @transform_8(%arg0: i32) -> (i32, i32) {
    %c0_i32 = arith.constant 0 : i32
    %c0_i32_0 = arith.constant 0 : i32
    %c0_i32_1 = arith.constant 0 : i32
    return %c0_i32, %c0_i32_0 : i32, i32
  }
  func.func @transform_9(%arg0: i32) -> (i32, i32) {
    %c0_i32 = arith.constant 0 : i32
    %c0_i32_0 = arith.constant 0 : i32
    %c0_i32_1 = arith.constant 0 : i32
    return %c0_i32, %c0_i32_0 : i32, i32
  }
  func.func @transform_10(%arg0: i32) -> (i32, i32) {
    %c0_i32 = arith.constant 0 : i32
    %c0_i32_0 = arith.constant 0 : i32
    %c0_i32_1 = arith.constant 0 : i32
    return %c0_i32, %c0_i32_0 : i32, i32
  }
  func.func @transform_11(%arg0: i32) -> (i32, i32) {
    %c0_i32 = arith.constant 0 : i32
    %c0_i32_0 = arith.constant 0 : i32
    %c0_i32_1 = arith.constant 0 : i32
    return %c0_i32, %c0_i32_0 : i32, i32
  }
  func.func @transform_12(%arg0: i32) -> (i32, i32) {
    %c0_i32 = arith.constant 0 : i32
    %c0_i32_0 = arith.constant 0 : i32
    %c0_i32_1 = arith.constant 0 : i32
    return %c0_i32, %c0_i32_0 : i32, i32
  }
  func.func @transform_13(%arg0: i32) -> (i32, i32) {
    %c0_i32 = arith.constant 0 : i32
    %c0_i32_0 = arith.constant 0 : i32
    return %c0_i32, %arg0 : i32, i32
  }
}

</mosaic_0001>

<llo_original>
// kernel: tpu_custom_call.1
$region0: #{tpu_custom_call.1}
  #allocation0 [shape = 'u32[]', space=smem, size = 0x4, offset = 0x4, fixed_abs, tag = 'smem constant byte address 0x4 - core index']
  #allocation1 [shape = 'u32[72,128]{1,0:T(1,128)}', space=vmem, size = 0x9000, scoped, tag = 'internal scratch']
  %s0 = inlined_call_operand.vmem [shape: f32[32,16], index: 0, kind: input, shape index: {}]
  %s1 = inlined_call_operand.vmem [shape: f32[256,32], index: 1, kind: input, shape index: {}]
  %s2 = inlined_call_operand.vmem [shape: f32[256,1], index: 2, kind: input, shape index: {}]
  %s3 = inlined_call_operand.vmem [shape: f32[256,32], index: 3, kind: input, shape index: {}]
  %s4 = inlined_call_operand.vmem [shape: f32[256,1], index: 4, kind: input, shape index: {}]
  %s5 = inlined_call_operand.vmem [shape: f32[64,256], index: 5, kind: input, shape index: {}]
  %s6 = inlined_call_operand.vmem [shape: f32[64,1], index: 6, kind: input, shape index: {}]
  %s7 = inlined_call_operand.vmem [shape: f32[64,256], index: 7, kind: input, shape index: {}]
  %s8 = inlined_call_operand.vmem [shape: f32[64,1], index: 8, kind: input, shape index: {}]
  %s9 = inlined_call_operand.vmem [shape: f32[32,64], index: 9, kind: input, shape index: {}]
  %s10 = inlined_call_operand.vmem [shape: f32[32,1], index: 10, kind: input, shape index: {}]
  %s11 = inlined_call_operand.vmem [shape: f32[8,32], index: 11, kind: input, shape index: {}]
  %s12 = inlined_call_operand.vmem [shape: f32[8,1], index: 12, kind: input, shape index: {}]
  %s13 = inlined_call_operand.hbm [shape: f32[8,16], index: 13, kind: output, shape index: {}]
  %s14 = sld [smem:[#allocation0]]
  $region62: #{tpu_custom_call.1} parent=0
    _
  %s16 = ssub.s32 1, %s14
  %s17 = scalar_select 0, %s16, %s14
  $region1: #{tpu_custom_call.1} parent=0
    #allocation2 [shape = 'u8[4096]{0}', space=vmem, size = 0x1000, scoped, tag = 'output window, operand 0, single buffered']
    #allocation3 [shape = 's32[1]{0}', space=sflag, size = 0x4, scoped, tag = 'scoped memory for tpu_custom_call.1']
    %18 = vsyncpa [#allocation3], 0
    // Predicated region
    $region2: #{tpu_custom_call.1} parent=1 // pred_check
      _
    $region3: #{tpu_custom_call.1} parent=1 // pred_check_branch
      %20 = sbr.rel (0) target = $region5
    $region4: #{tpu_custom_call.1} parent=1 // pred_region
      _
    $region5: #{tpu_custom_call.1} parent=1 // pred_fallthru
      _
    // Predicated region
    $region6: #{tpu_custom_call.1} parent=1 // pred_check
      _
    $region7: #{tpu_custom_call.1} parent=1 // pred_check_branch
      %22 = sbr.rel (0) target = $region9
    $region8: #{tpu_custom_call.1} parent=1 // pred_region
      _
    $region9: #{tpu_custom_call.1} parent=1 // pred_fallthru
      _
    // Predicated region
    $region10: #{tpu_custom_call.1} parent=1 // pred_check
      _
    $region11: #{tpu_custom_call.1} parent=1 // pred_check_branch
      %24 = sbr.rel (0) target = $region13
    $region12: #{tpu_custom_call.1} parent=1 // pred_region
      _
    $region13: #{tpu_custom_call.1} parent=1 // pred_fallthru
      _
    // Predicated region
    $region14: #{tpu_custom_call.1} parent=1 // pred_check
      _
    $region15: #{tpu_custom_call.1} parent=1 // pred_check_branch
      %26 = sbr.rel (0) target = $region17
    $region16: #{tpu_custom_call.1} parent=1 // pred_region
      _
    $region17: #{tpu_custom_call.1} parent=1 // pred_fallthru
      _
    // Predicated region
    $region18: #{tpu_custom_call.1} parent=1 // pred_check
      _
    $region19: #{tpu_custom_call.1} parent=1 // pred_check_branch
      %28 = sbr.rel (0) target = $region21
    $region20: #{tpu_custom_call.1} parent=1 // pred_region
      _
    $region21: #{tpu_custom_call.1} parent=1 // pred_fallthru
      _
    // Predicated region
    $region22: #{tpu_custom_call.1} parent=1 // pred_check
      _
    $region23: #{tpu_custom_call.1} parent=1 // pred_check_branch
      %30 = sbr.rel (0) target = $region25
    $region24: #{tpu_custom_call.1} parent=1 // pred_region
      _
    $region25: #{tpu_custom_call.1} parent=1 // pred_fallthru
      _
    // Predicated region
    $region26: #{tpu_custom_call.1} parent=1 // pred_check
      _
    $region27: #{tpu_custom_call.1} parent=1 // pred_check_branch
      %32 = sbr.rel (0) target = $region29
    $region28: #{tpu_custom_call.1} parent=1 // pred_region
      _
    $region29: #{tpu_custom_call.1} parent=1 // pred_fallthru
      _
    // Predicated region
    $region30: #{tpu_custom_call.1} parent=1 // pred_check
      _
    $region31: #{tpu_custom_call.1} parent=1 // pred_check_branch
      %34 = sbr.rel (0) target = $region33
    $region32: #{tpu_custom_call.1} parent=1 // pred_region
      _
    $region33: #{tpu_custom_call.1} parent=1 // pred_fallthru
      _
    // Predicated region
    $region34: #{tpu_custom_call.1} parent=1 // pred_check
      _
    $region35: #{tpu_custom_call.1} parent=1 // pred_check_branch
      %36 = sbr.rel (0) target = $region37
    $region36: #{tpu_custom_call.1} parent=1 // pred_region
      _
    $region37: #{tpu_custom_call.1} parent=1 // pred_fallthru
      _
    // Predicated region
    $region38: #{tpu_custom_call.1} parent=1 // pred_check
      _
    $region39: #{tpu_custom_call.1} parent=1 // pred_check_branch
      %38 = sbr.rel (0) target = $region41
    $region40: #{tpu_custom_call.1} parent=1 // pred_region
      _
    $region41: #{tpu_custom_call.1} parent=1 // pred_fallthru
      _
    // Predicated region
    $region42: #{tpu_custom_call.1} parent=1 // pred_check
      _
    $region43: #{tpu_custom_call.1} parent=1 // pred_check_branch
      %40 = sbr.rel (0) target = $region45
    $region44: #{tpu_custom_call.1} parent=1 // pred_region
      _
    $region45: #{tpu_custom_call.1} parent=1 // pred_fallthru
      _
    // Predicated region
    $region46: #{tpu_custom_call.1} parent=1 // pred_check
      _
    $region47: #{tpu_custom_call.1} parent=1 // pred_check_branch
      %42 = sbr.rel (0) target = $region49
    $region48: #{tpu_custom_call.1} parent=1 // pred_region
      _
    $region49: #{tpu_custom_call.1} parent=1 // pred_fallthru
      _
    // Predicated region
    $region50: #{tpu_custom_call.1} parent=1 // pred_check
      _
    $region51: #{tpu_custom_call.1} parent=1 // pred_check_branch
      %44 = sbr.rel (0) target = $region53
    $region52: #{tpu_custom_call.1} parent=1 // pred_region
      _
    $region53: #{tpu_custom_call.1} parent=1 // pred_fallthru
      _
    %v45 = vld [vmem:[%s0] sm:$0xff]
    %v46 = vld [vmem:[%s0 + $0x8] sm:$0xff]
    %v47 = vld [vmem:[%s0 + $0x10] sm:$0xff]
    %v48 = vld [vmem:[%s0 + $0x18] sm:$0xff]
    %v49 = vld [vmem:[%s1] sm:$0xff]
    %v50 = vld [vmem:[%s1 + $0x8] sm:$0xff]
    %v51 = vld [vmem:[%s1 + $0x10] sm:$0xff]
    %v52 = vld [vmem:[%s1 + $0x18] sm:$0xff]
    %v53 = vld [vmem:[%s1 + $0x20] sm:$0xff]
    %v54 = vld [vmem:[%s1 + $0x28] sm:$0xff]
    %v55 = vld [vmem:[%s1 + $0x30] sm:$0xff]
    %v56 = vld [vmem:[%s1 + $0x38] sm:$0xff]
    %v57 = vld [vmem:[%s1 + $0x40] sm:$0xff]
    %v58 = vld [vmem:[%s1 + $0x48] sm:$0xff]
    %v59 = vld [vmem:[%s1 + $0x50] sm:$0xff]
    %v60 = vld [vmem:[%s1 + $0x58] sm:$0xff]
    %v61 = vld [vmem:[%s1 + $0x60] sm:$0xff]
    %v62 = vld [vmem:[%s1 + $0x68] sm:$0xff]
    %v63 = vld [vmem:[%s1 + $0x70] sm:$0xff]
    %v64 = vld [vmem:[%s1 + $0x78] sm:$0xff]
    %v65 = vld [vmem:[%s1 + $0x80] sm:$0xff]
    %v66 = vld [vmem:[%s1 + $0x88] sm:$0xff]
    %v67 = vld [vmem:[%s1 + $0x90] sm:$0xff]
    %v68 = vld [vmem:[%s1 + $0x98] sm:$0xff]
    %v69 = vld [vmem:[%s1 + $0xa0] sm:$0xff]
    %v70 = vld [vmem:[%s1 + $0xa8] sm:$0xff]
    %v71 = vld [vmem:[%s1 + $0xb0] sm:$0xff]
    %v72 = vld [vmem:[%s1 + $0xb8] sm:$0xff]
    %v73 = vld [vmem:[%s1 + $0xc0] sm:$0xff]
    %v74 = vld [vmem:[%s1 + $0xc8] sm:$0xff]
    %v75 = vld [vmem:[%s1 + $0xd0] sm:$0xff]
    %v76 = vld [vmem:[%s1 + $0xd8] sm:$0xff]
    %v77 = vld [vmem:[%s1 + $0xe0] sm:$0xff]
    %v78 = vld [vmem:[%s1 + $0xe8] sm:$0xff]
    %v79 = vld [vmem:[%s1 + $0xf0] sm:$0xff]
    %v80 = vld [vmem:[%s1 + $0xf8] sm:$0xff]
    %v81 = vld [vmem:[%s2] sm:$0xff]
    %v82 = vld [vmem:[%s2 + $0x8] sm:$0xff]
    %v83 = vld [vmem:[%s2 + $0x10] sm:$0xff]
    %v84 = vld [vmem:[%s2 + $0x18] sm:$0xff]
    %v85 = vld [vmem:[%s2 + $0x20] sm:$0xff]
    %v86 = vld [vmem:[%s2 + $0x28] sm:$0xff]
    %v87 = vld [vmem:[%s2 + $0x30] sm:$0xff]
    %v88 = vld [vmem:[%s2 + $0x38] sm:$0xff]
    %v89 = vld [vmem:[%s2 + $0x40] sm:$0xff]
    %v90 = vld [vmem:[%s2 + $0x48] sm:$0xff]
    %v91 = vld [vmem:[%s2 + $0x50] sm:$0xff]
    %v92 = vld [vmem:[%s2 + $0x58] sm:$0xff]
    %v93 = vld [vmem:[%s2 + $0x60] sm:$0xff]
    %v94 = vld [vmem:[%s2 + $0x68] sm:$0xff]
    %v95 = vld [vmem:[%s2 + $0x70] sm:$0xff]
    %v96 = vld [vmem:[%s2 + $0x78] sm:$0xff]
    %v97 = vld [vmem:[%s2 + $0x80] sm:$0xff]
    %v98 = vld [vmem:[%s2 + $0x88] sm:$0xff]
    %v99 = vld [vmem:[%s2 + $0x90] sm:$0xff]
    %v100 = vld [vmem:[%s2 + $0x98] sm:$0xff]
    %v101 = vld [vmem:[%s2 + $0xa0] sm:$0xff]
    %v102 = vld [vmem:[%s2 + $0xa8] sm:$0xff]
    %v103 = vld [vmem:[%s2 + $0xb0] sm:$0xff]
    %v104 = vld [vmem:[%s2 + $0xb8] sm:$0xff]
    %v105 = vld [vmem:[%s2 + $0xc0] sm:$0xff]
    %v106 = vld [vmem:[%s2 + $0xc8] sm:$0xff]
    %v107 = vld [vmem:[%s2 + $0xd0] sm:$0xff]
    %v108 = vld [vmem:[%s2 + $0xd8] sm:$0xff]
    %v109 = vld [vmem:[%s2 + $0xe0] sm:$0xff]
    %v110 = vld [vmem:[%s2 + $0xe8] sm:$0xff]
    %v111 = vld [vmem:[%s2 + $0xf0] sm:$0xff]
    %v112 = vld [vmem:[%s2 + $0xf8] sm:$0xff]
    %114 = vset.pattern.permute.xlu0 0
    %115 = vperm.xlu0 %114, %v81
    %v116 = vpop.permute.xlu0 %115
    %119 = vset.pattern.permute.xlu0 0
    %120 = vperm.xlu0 %119, %v82
    %v121 = vpop.permute.xlu0 %120
    %124 = vset.pattern.permute.xlu0 0
    %125 = vperm.xlu0 %124, %v83
    %v126 = vpop.permute.xlu0 %125
    %129 = vset.pattern.permute.xlu0 0
    %130 = vperm.xlu0 %129, %v84
    %v131 = vpop.permute.xlu0 %130
    %134 = vset.pattern.permute.xlu0 0
    %135 = vperm.xlu0 %134, %v85
    %v136 = vpop.permute.xlu0 %135
    %139 = vset.pattern.permute.xlu0 0
    %140 = vperm.xlu0 %139, %v86
    %v141 = vpop.permute.xlu0 %140
    %144 = vset.pattern.permute.xlu0 0
    %145 = vperm.xlu0 %144, %v87
    %v146 = vpop.permute.xlu0 %145
    %149 = vset.pattern.permute.xlu0 0
    %150 = vperm.xlu0 %149, %v88
    %v151 = vpop.permute.xlu0 %150
    %154 = vset.pattern.permute.xlu0 0
    %155 = vperm.xlu0 %154, %v89
    %v156 = vpop.permute.xlu0 %155
    %159 = vset.pattern.permute.xlu0 0
    %160 = vperm.xlu0 %159, %v90
    %v161 = vpop.permute.xlu0 %160
    %164 = vset.pattern.permute.xlu0 0
    %165 = vperm.xlu0 %164, %v91
    %v166 = vpop.permute.xlu0 %165
    %169 = vset.pattern.permute.xlu0 0
    %170 = vperm.xlu0 %169, %v92
    %v171 = vpop.permute.xlu0 %170
    %174 = vset.pattern.permute.xlu0 0
    %175 = vperm.xlu0 %174, %v93
    %v176 = vpop.permute.xlu0 %175
    %179 = vset.pattern.permute.xlu0 0
    %180 = vperm.xlu0 %179, %v94
    %v181 = vpop.permute.xlu0 %180
    %184 = vset.pattern.permute.xlu0 0
    %185 = vperm.xlu0 %184, %v95
    %v186 = vpop.permute.xlu0 %185
    %189 = vset.pattern.permute.xlu0 0
    %190 = vperm.xlu0 %189, %v96
    %v191 = vpop.permute.xlu0 %190
    %194 = vset.pattern.permute.xlu0 0
    %195 = vperm.xlu0 %194, %v97
    %v196 = vpop.permute.xlu0 %195
    %199 = vset.pattern.permute.xlu0 0
    %200 = vperm.xlu0 %199, %v98
    %v201 = vpop.permute.xlu0 %200
    %204 = vset.pattern.permute.xlu0 0
    %205 = vperm.xlu0 %204, %v99
    %v206 = vpop.permute.xlu0 %205
    %209 = vset.pattern.permute.xlu0 0
    %210 = vperm.xlu0 %209, %v100
    %v211 = vpop.permute.xlu0 %210
    %214 = vset.pattern.permute.xlu0 0
    %215 = vperm.xlu0 %214, %v101
    %v216 = vpop.permute.xlu0 %215
    %219 = vset.pattern.permute.xlu0 0
    %220 = vperm.xlu0 %219, %v102
    %v221 = vpop.permute.xlu0 %220
    %224 = vset.pattern.permute.xlu0 0
    %225 = vperm.xlu0 %224, %v103
    %v226 = vpop.permute.xlu0 %225
    %229 = vset.pattern.permute.xlu0 0
    %230 = vperm.xlu0 %229, %v104
    %v231 = vpop.permute.xlu0 %230
    %234 = vset.pattern.permute.xlu0 0
    %235 = vperm.xlu0 %234, %v105
    %v236 = vpop.permute.xlu0 %235
    %239 = vset.pattern.permute.xlu0 0
    %240 = vperm.xlu0 %239, %v106
    %v241 = vpop.permute.xlu0 %240
    %244 = vset.pattern.permute.xlu0 0
    %245 = vperm.xlu0 %244, %v107
    %v246 = vpop.permute.xlu0 %245
    %249 = vset.pattern.permute.xlu0 0
    %250 = vperm.xlu0 %249, %v108
    %v251 = vpop.permute.xlu0 %250
    %254 = vset.pattern.permute.xlu0 0
    %255 = vperm.xlu0 %254, %v109
    %v256 = vpop.permute.xlu0 %255
    %259 = vset.pattern.permute.xlu0 0
    %260 = vperm.xlu0 %259, %v110
    %v261 = vpop.permute.xlu0 %260
    %264 = vset.pattern.permute.xlu0 0
    %265 = vperm.xlu0 %264, %v111
    %v266 = vpop.permute.xlu0 %265
    %269 = vset.pattern.permute.xlu0 0
    %270 = vperm.xlu0 %269, %v112
    %v271 = vpop.permute.xlu0 %270
    %vm273 = vcmask 261120
    %v275 = vsel %vm273, %v49, 0
    %v278 = vsel %vm273, %v50, 0
    %v281 = vsel %vm273, %v51, 0
    %v284 = vsel %vm273, %v52, 0
    %v287 = vsel %vm273, %v53, 0
    %v290 = vsel %vm273, %v54, 0
    %v293 = vsel %vm273, %v55, 0
    %v296 = vsel %vm273, %v56, 0
    %v299 = vsel %vm273, %v57, 0
    %v302 = vsel %vm273, %v58, 0
    %v305 = vsel %vm273, %v59, 0
    %v308 = vsel %vm273, %v60, 0
    %v311 = vsel %vm273, %v61, 0
    %v314 = vsel %vm273, %v62, 0
    %v317 = vsel %vm273, %v63, 0
    %v320 = vsel %vm273, %v64, 0
    %v323 = vsel %vm273, %v65, 0
    %v326 = vsel %vm273, %v66, 0
    %v329 = vsel %vm273, %v67, 0
    %v332 = vsel %vm273, %v68, 0
    %v335 = vsel %vm273, %v69, 0
    %v338 = vsel %vm273, %v70, 0
    %v341 = vsel %vm273, %v71, 0
    %v344 = vsel %vm273, %v72, 0
    %v347 = vsel %vm273, %v73, 0
    %v350 = vsel %vm273, %v74, 0
    %v353 = vsel %vm273, %v75, 0
    %v356 = vsel %vm273, %v76, 0
    %v359 = vsel %vm273, %v77, 0
    %v362 = vsel %vm273, %v78, 0
    %v365 = vsel %vm273, %v79, 0
    %v368 = vsel %vm273, %v80, 0
    %370 = vmatpush.msra.mxu0 0.0
    %371 = vmatpush.msra.mxu0 0.0
    %372 = vmatpush.msra.mxu0 0.0
    %373 = vmatpush.msra.mxu0 0.0
    %374 = vmatpush.msra.mxu0 0.0
    %375 = vmatpush.msra.mxu0 0.0
    %376 = vmatpush.msra.mxu0 0.0
    %377 = vmatpush.msra.mxu0 0.0
    %378 = vmatpush.msra.mxu0 0.0
    %379 = vmatpush.msra.mxu0 0.0
    %380 = vmatpush.msra.mxu0 0.0
    %381 = vmatpush.msra.mxu0 0.0
    %382 = vmatpush.msra.mxu0 %v48
    %383 = vmatpush.msra.mxu0 %v47
    %384 = vmatpush.msra.mxu0 %v46
    %385 = vmatpush.msra.mxu0 %v45
    %386 = vmatmul.f32.gmra.mxu0 %v275
    %v387 = vpop.f32.mrf.mxu0
    %v388 = vadd.f32 %v116, %v387
    %389 = vmatmul.f32.gmra.mxu0 %v278
    %v390 = vpop.f32.mrf.mxu0
    %v391 = vadd.f32 %v121, %v390
    %392 = vmatmul.f32.gmra.mxu0 %v281
    %v393 = vpop.f32.mrf.mxu0
    %v394 = vadd.f32 %v126, %v393
    %395 = vmatmul.f32.gmra.mxu0 %v284
    %v396 = vpop.f32.mrf.mxu0
    %v397 = vadd.f32 %v131, %v396
    %398 = vmatmul.f32.gmra.mxu0 %v287
    %v399 = vpop.f32.mrf.mxu0
    %v400 = vadd.f32 %v136, %v399
    %401 = vmatmul.f32.gmra.mxu0 %v290
    %v402 = vpop.f32.mrf.mxu0
    %v403 = vadd.f32 %v141, %v402
    %404 = vmatmul.f32.gmra.mxu0 %v293
    %v405 = vpop.f32.mrf.mxu0
    %v406 = vadd.f32 %v146, %v405
    %407 = vmatmul.f32.gmra.mxu0 %v296
    %v408 = vpop.f32.mrf.mxu0
    %v409 = vadd.f32 %v151, %v408
    %410 = vmatmul.f32.gmra.mxu0 %v299
    %v411 = vpop.f32.mrf.mxu0
    %v412 = vadd.f32 %v156, %v411
    %413 = vmatmul.f32.gmra.mxu0 %v302
    %v414 = vpop.f32.mrf.mxu0
    %v415 = vadd.f32 %v161, %v414
    %416 = vmatmul.f32.gmra.mxu0 %v305
    %v417 = vpop.f32.mrf.mxu0
    %v418 = vadd.f32 %v166, %v417
    %419 = vmatmul.f32.gmra.mxu0 %v308
    %v420 = vpop.f32.mrf.mxu0
    %v421 = vadd.f32 %v171, %v420
    %422 = vmatmul.f32.gmra.mxu0 %v311
    %v423 = vpop.f32.mrf.mxu0
    %v424 = vadd.f32 %v176, %v423
    %425 = vmatmul.f32.gmra.mxu0 %v314
    %v426 = vpop.f32.mrf.mxu0
    %v427 = vadd.f32 %v181, %v426
    %428 = vmatmul.f32.gmra.mxu0 %v317
    %v429 = vpop.f32.mrf.mxu0
    %v430 = vadd.f32 %v186, %v429
    %431 = vmatmul.f32.gmra.mxu0 %v320
    %v432 = vpop.f32.mrf.mxu0
    %v433 = vadd.f32 %v191, %v432
    %434 = vmatmul.f32.gmra.mxu0 %v323
    %v435 = vpop.f32.mrf.mxu0
    %v436 = vadd.f32 %v196, %v435
    %437 = vmatmul.f32.gmra.mxu0 %v326
    %v438 = vpop.f32.mrf.mxu0
    %v439 = vadd.f32 %v201, %v438
    %440 = vmatmul.f32.gmra.mxu0 %v329
    %v441 = vpop.f32.mrf.mxu0
    %v442 = vadd.f32 %v206, %v441
    %443 = vmatmul.f32.gmra.mxu0 %v332
    %v444 = vpop.f32.mrf.mxu0
    %v445 = vadd.f32 %v211, %v444
    %446 = vmatmul.f32.gmra.mxu0 %v335
    %v447 = vpop.f32.mrf.mxu0
    %v448 = vadd.f32 %v216, %v447
    %449 = vmatmul.f32.gmra.mxu0 %v338
    %v450 = vpop.f32.mrf.mxu0
    %v451 = vadd.f32 %v221, %v450
    %452 = vmatmul.f32.gmra.mxu0 %v341
    %v453 = vpop.f32.mrf.mxu0
    %v454 = vadd.f32 %v226, %v453
    %455 = vmatmul.f32.gmra.mxu0 %v344
    %v456 = vpop.f32.mrf.mxu0
    %v457 = vadd.f32 %v231, %v456
    %458 = vmatmul.f32.gmra.mxu0 %v347
    %v459 = vpop.f32.mrf.mxu0
    %v460 = vadd.f32 %v236, %v459
    %461 = vmatmul.f32.gmra.mxu0 %v350
    %v462 = vpop.f32.mrf.mxu0
    %v463 = vadd.f32 %v241, %v462
    %464 = vmatmul.f32.gmra.mxu0 %v353
    %v465 = vpop.f32.mrf.mxu0
    %v466 = vadd.f32 %v246, %v465
    %467 = vmatmul.f32.gmra.mxu0 %v356
    %v468 = vpop.f32.mrf.mxu0
    %v469 = vadd.f32 %v251, %v468
    %470 = vmatmul.f32.gmra.mxu0 %v359
    %v471 = vpop.f32.mrf.mxu0
    %v472 = vadd.f32 %v256, %v471
    %473 = vmatmul.f32.gmra.mxu0 %v362
    %v474 = vpop.f32.mrf.mxu0
    %v475 = vadd.f32 %v261, %v474
    %476 = vmatmul.f32.gmra.mxu0 %v365
    %v477 = vpop.f32.mrf.mxu0
    %v478 = vadd.f32 %v266, %v477
    %479 = vmatmul.f32.gmra.mxu0 %v368
    %v480 = vpop.f32.mrf.mxu0
    %v481 = vadd.f32 %v271, %v480
    %482 = vdwg.mxu0
    %v483 = vld [vmem:[%s3] sm:$0xff]
    %v484 = vld [vmem:[%s3 + $0x8] sm:$0xff]
    %v485 = vld [vmem:[%s3 + $0x10] sm:$0xff]
    %v486 = vld [vmem:[%s3 + $0x18] sm:$0xff]
    %v487 = vld [vmem:[%s3 + $0x20] sm:$0xff]
    %v488 = vld [vmem:[%s3 + $0x28] sm:$0xff]
    %v489 = vld [vmem:[%s3 + $0x30] sm:$0xff]
    %v490 = vld [vmem:[%s3 + $0x38] sm:$0xff]
    %v491 = vld [vmem:[%s3 + $0x40] sm:$0xff]
    %v492 = vld [vmem:[%s3 + $0x48] sm:$0xff]
    %v493 = vld [vmem:[%s3 + $0x50] sm:$0xff]
    %v494 = vld [vmem:[%s3 + $0x58] sm:$0xff]
    %v495 = vld [vmem:[%s3 + $0x60] sm:$0xff]
    %v496 = vld [vmem:[%s3 + $0x68] sm:$0xff]
    %v497 = vld [vmem:[%s3 + $0x70] sm:$0xff]
    %v498 = vld [vmem:[%s3 + $0x78] sm:$0xff]
    %v499 = vld [vmem:[%s3 + $0x80] sm:$0xff]
    %v500 = vld [vmem:[%s3 + $0x88] sm:$0xff]
    %v501 = vld [vmem:[%s3 + $0x90] sm:$0xff]
    %v502 = vld [vmem:[%s3 + $0x98] sm:$0xff]
    %v503 = vld [vmem:[%s3 + $0xa0] sm:$0xff]
    %v504 = vld [vmem:[%s3 + $0xa8] sm:$0xff]
    %v505 = vld [vmem:[%s3 + $0xb0] sm:$0xff]
    %v506 = vld [vmem:[%s3 + $0xb8] sm:$0xff]
    %v507 = vld [vmem:[%s3 + $0xc0] sm:$0xff]
    %v508 = vld [vmem:[%s3 + $0xc8] sm:$0xff]
    %v509 = vld [vmem:[%s3 + $0xd0] sm:$0xff]
    %v510 = vld [vmem:[%s3 + $0xd8] sm:$0xff]
    %v511 = vld [vmem:[%s3 + $0xe0] sm:$0xff]
    %v512 = vld [vmem:[%s3 + $0xe8] sm:$0xff]
    %v513 = vld [vmem:[%s3 + $0xf0] sm:$0xff]
    %v514 = vld [vmem:[%s3 + $0xf8] sm:$0xff]
    %v515 = vld [vmem:[%s4] sm:$0xff]
    %v516 = vld [vmem:[%s4 + $0x8] sm:$0xff]
    %v517 = vld [vmem:[%s4 + $0x10] sm:$0xff]
    %v518 = vld [vmem:[%s4 + $0x18] sm:$0xff]
    %v519 = vld [vmem:[%s4 + $0x20] sm:$0xff]
    %v520 = vld [vmem:[%s4 + $0x28] sm:$0xff]
    %v521 = vld [vmem:[%s4 + $0x30] sm:$0xff]
    %v522 = vld [vmem:[%s4 + $0x38] sm:$0xff]
    %v523 = vld [vmem:[%s4 + $0x40] sm:$0xff]
    %v524 = vld [vmem:[%s4 + $0x48] sm:$0xff]
    %v525 = vld [vmem:[%s4 + $0x50] sm:$0xff]
    %v526 = vld [vmem:[%s4 + $0x58] sm:$0xff]
    %v527 = vld [vmem:[%s4 + $0x60] sm:$0xff]
    %v528 = vld [vmem:[%s4 + $0x68] sm:$0xff]
    %v529 = vld [vmem:[%s4 + $0x70] sm:$0xff]
    %v530 = vld [vmem:[%s4 + $0x78] sm:$0xff]
    %v531 = vld [vmem:[%s4 + $0x80] sm:$0xff]
    %v532 = vld [vmem:[%s4 + $0x88] sm:$0xff]
    %v533 = vld [vmem:[%s4 + $0x90] sm:$0xff]
    %v534 = vld [vmem:[%s4 + $0x98] sm:$0xff]
    %v535 = vld [vmem:[%s4 + $0xa0] sm:$0xff]
    %v536 = vld [vmem:[%s4 + $0xa8] sm:$0xff]
    %v537 = vld [vmem:[%s4 + $0xb0] sm:$0xff]
    %v538 = vld [vmem:[%s4 + $0xb8] sm:$0xff]
    %v539 = vld [vmem:[%s4 + $0xc0] sm:$0xff]
    %v540 = vld [vmem:[%s4 + $0xc8] sm:$0xff]
    %v541 = vld [vmem:[%s4 + $0xd0] sm:$0xff]
    %v542 = vld [vmem:[%s4 + $0xd8] sm:$0xff]
    %v543 = vld [vmem:[%s4 + $0xe0] sm:$0xff]
    %v544 = vld [vmem:[%s4 + $0xe8] sm:$0xff]
    %v545 = vld [vmem:[%s4 + $0xf0] sm:$0xff]
    %v546 = vld [vmem:[%s4 + $0xf8] sm:$0xff]
    %548 = vset.pattern.permute.xlu0 0
    %549 = vperm.xlu0 %548, %v515
    %v550 = vpop.permute.xlu0 %549
    %553 = vset.pattern.permute.xlu0 0
    %554 = vperm.xlu0 %553, %v516
    %v555 = vpop.permute.xlu0 %554
    %558 = vset.pattern.permute.xlu0 0
    %559 = vperm.xlu0 %558, %v517
    %v560 = vpop.permute.xlu0 %559
    %563 = vset.pattern.permute.xlu0 0
    %564 = vperm.xlu0 %563, %v518
    %v565 = vpop.permute.xlu0 %564
    %568 = vset.pattern.permute.xlu0 0
    %569 = vperm.xlu0 %568, %v519
    %v570 = vpop.permute.xlu0 %569
    %573 = vset.pattern.permute.xlu0 0
    %574 = vperm.xlu0 %573, %v520
    %v575 = vpop.permute.xlu0 %574
    %578 = vset.pattern.permute.xlu0 0
    %579 = vperm.xlu0 %578, %v521
    %v580 = vpop.permute.xlu0 %579
    %583 = vset.pattern.permute.xlu0 0
    %584 = vperm.xlu0 %583, %v522
    %v585 = vpop.permute.xlu0 %584
    %588 = vset.pattern.permute.xlu0 0
    %589 = vperm.xlu0 %588, %v523
    %v590 = vpop.permute.xlu0 %589
    %593 = vset.pattern.permute.xlu0 0
    %594 = vperm.xlu0 %593, %v524
    %v595 = vpop.permute.xlu0 %594
    %598 = vset.pattern.permute.xlu0 0
    %599 = vperm.xlu0 %598, %v525
    %v600 = vpop.permute.xlu0 %599
    %603 = vset.pattern.permute.xlu0 0
    %604 = vperm.xlu0 %603, %v526
    %v605 = vpop.permute.xlu0 %604
    %608 = vset.pattern.permute.xlu0 0
    %609 = vperm.xlu0 %608, %v527
    %v610 = vpop.permute.xlu0 %609
    %613 = vset.pattern.permute.xlu0 0
    %614 = vperm.xlu0 %613, %v528
    %v615 = vpop.permute.xlu0 %614
    %618 = vset.pattern.permute.xlu0 0
    %619 = vperm.xlu0 %618, %v529
    %v620 = vpop.permute.xlu0 %619
    %623 = vset.pattern.permute.xlu0 0
    %624 = vperm.xlu0 %623, %v530
    %v625 = vpop.permute.xlu0 %624
    %628 = vset.pattern.permute.xlu0 0
    %629 = vperm.xlu0 %628, %v531
    %v630 = vpop.permute.xlu0 %629
    %633 = vset.pattern.permute.xlu0 0
    %634 = vperm.xlu0 %633, %v532
    %v635 = vpop.permute.xlu0 %634
    %638 = vset.pattern.permute.xlu0 0
    %639 = vperm.xlu0 %638, %v533
    %v640 = vpop.permute.xlu0 %639
    %643 = vset.pattern.permute.xlu0 0
    %644 = vperm.xlu0 %643, %v534
    %v645 = vpop.permute.xlu0 %644
    %648 = vset.pattern.permute.xlu0 0
    %649 = vperm.xlu0 %648, %v535
    %v650 = vpop.permute.xlu0 %649
    %653 = vset.pattern.permute.xlu0 0
    %654 = vperm.xlu0 %653, %v536
    %v655 = vpop.permute.xlu0 %654
    %658 = vset.pattern.permute.xlu0 0
    %659 = vperm.xlu0 %658, %v537
    %v660 = vpop.permute.xlu0 %659
    %663 = vset.pattern.permute.xlu0 0
    %664 = vperm.xlu0 %663, %v538
    %v665 = vpop.permute.xlu0 %664
    %668 = vset.pattern.permute.xlu0 0
    %669 = vperm.xlu0 %668, %v539
    %v670 = vpop.permute.xlu0 %669
    %673 = vset.pattern.permute.xlu0 0
    %674 = vperm.xlu0 %673, %v540
    %v675 = vpop.permute.xlu0 %674
    %678 = vset.pattern.permute.xlu0 0
    %679 = vperm.xlu0 %678, %v541
    %v680 = vpop.permute.xlu0 %679
    %683 = vset.pattern.permute.xlu0 0
    %684 = vperm.xlu0 %683, %v542
    %v685 = vpop.permute.xlu0 %684
    %688 = vset.pattern.permute.xlu0 0
    %689 = vperm.xlu0 %688, %v543
    %v690 = vpop.permute.xlu0 %689
    %693 = vset.pattern.permute.xlu0 0
    %694 = vperm.xlu0 %693, %v544
    %v695 = vpop.permute.xlu0 %694
    %698 = vset.pattern.permute.xlu0 0
    %699 = vperm.xlu0 %698, %v545
    %v700 = vpop.permute.xlu0 %699
    %703 = vset.pattern.permute.xlu0 0
    %704 = vperm.xlu0 %703, %v546
    %v705 = vpop.permute.xlu0 %704
    %v708 = vsel %vm273, %v483, 0
    %v711 = vsel %vm273, %v484, 0
    %v714 = vsel %vm273, %v485, 0
    %v717 = vsel %vm273, %v486, 0
    %v720 = vsel %vm273, %v487, 0
    %v723 = vsel %vm273, %v488, 0
    %v726 = vsel %vm273, %v489, 0
    %v729 = vsel %vm273, %v490, 0
    %v732 = vsel %vm273, %v491, 0
    %v735 = vsel %vm273, %v492, 0
    %v738 = vsel %vm273, %v493, 0
    %v741 = vsel %vm273, %v494, 0
    %v744 = vsel %vm273, %v495, 0
    %v747 = vsel %vm273, %v496, 0
    %v750 = vsel %vm273, %v497, 0
    %v753 = vsel %vm273, %v498, 0
    %v756 = vsel %vm273, %v499, 0
    %v759 = vsel %vm273, %v500, 0
    %v762 = vsel %vm273, %v501, 0
    %v765 = vsel %vm273, %v502, 0
    %v768 = vsel %vm273, %v503, 0
    %v771 = vsel %vm273, %v504, 0
    %v774 = vsel %vm273, %v505, 0
    %v777 = vsel %vm273, %v506, 0
    %v780 = vsel %vm273, %v507, 0
    %v783 = vsel %vm273, %v508, 0
    %v786 = vsel %vm273, %v509, 0
    %v789 = vsel %vm273, %v510, 0
    %v792 = vsel %vm273, %v511, 0
    %v795 = vsel %vm273, %v512, 0
    %v798 = vsel %vm273, %v513, 0
    %v801 = vsel %vm273, %v514, 0
    %803 = vmatpush.msra.mxu0 0.0
    %804 = vmatpush.msra.mxu0 0.0
    %805 = vmatpush.msra.mxu0 0.0
    %806 = vmatpush.msra.mxu0 0.0
    %807 = vmatpush.msra.mxu0 0.0
    %808 = vmatpush.msra.mxu0 0.0
    %809 = vmatpush.msra.mxu0 0.0
    %810 = vmatpush.msra.mxu0 0.0
    %811 = vmatpush.msra.mxu0 0.0
    %812 = vmatpush.msra.mxu0 0.0
    %813 = vmatpush.msra.mxu0 0.0
    %814 = vmatpush.msra.mxu0 0.0
    %815 = vmatpush.msra.mxu0 %v48
    %816 = vmatpush.msra.mxu0 %v47
    %817 = vmatpush.msra.mxu0 %v46
    %818 = vmatpush.msra.mxu0 %v45
    %819 = vmatmul.f32.gmra.mxu0 %v708
    %v820 = vpop.f32.mrf.mxu0
    %v821 = vadd.f32 %v550, %v820
    %822 = vmatmul.f32.gmra.mxu0 %v711
    %v823 = vpop.f32.mrf.mxu0
    %v824 = vadd.f32 %v555, %v823
    %825 = vmatmul.f32.gmra.mxu0 %v714
    %v826 = vpop.f32.mrf.mxu0
    %v827 = vadd.f32 %v560, %v826
    %828 = vmatmul.f32.gmra.mxu0 %v717
    %v829 = vpop.f32.mrf.mxu0
    %v830 = vadd.f32 %v565, %v829
    %831 = vmatmul.f32.gmra.mxu0 %v720
    %v832 = vpop.f32.mrf.mxu0
    %v833 = vadd.f32 %v570, %v832
    %834 = vmatmul.f32.gmra.mxu0 %v723
    %v835 = vpop.f32.mrf.mxu0
    %v836 = vadd.f32 %v575, %v835
    %837 = vmatmul.f32.gmra.mxu0 %v726
    %v838 = vpop.f32.mrf.mxu0
    %v839 = vadd.f32 %v580, %v838
    %840 = vmatmul.f32.gmra.mxu0 %v729
    %v841 = vpop.f32.mrf.mxu0
    %v842 = vadd.f32 %v585, %v841
    %843 = vmatmul.f32.gmra.mxu0 %v732
    %v844 = vpop.f32.mrf.mxu0
    %v845 = vadd.f32 %v590, %v844
    %846 = vmatmul.f32.gmra.mxu0 %v735
    %v847 = vpop.f32.mrf.mxu0
    %v848 = vadd.f32 %v595, %v847
    %849 = vmatmul.f32.gmra.mxu0 %v738
    %v850 = vpop.f32.mrf.mxu0
    %v851 = vadd.f32 %v600, %v850
    %852 = vmatmul.f32.gmra.mxu0 %v741
    %v853 = vpop.f32.mrf.mxu0
    %v854 = vadd.f32 %v605, %v853
    %855 = vmatmul.f32.gmra.mxu0 %v744
    %v856 = vpop.f32.mrf.mxu0
    %v857 = vadd.f32 %v610, %v856
    %858 = vmatmul.f32.gmra.mxu0 %v747
    %v859 = vpop.f32.mrf.mxu0
    %v860 = vadd.f32 %v615, %v859
    %861 = vmatmul.f32.gmra.mxu0 %v750
    %v862 = vpop.f32.mrf.mxu0
    %v863 = vadd.f32 %v620, %v862
    %864 = vmatmul.f32.gmra.mxu0 %v753
    %v865 = vpop.f32.mrf.mxu0
    %v866 = vadd.f32 %v625, %v865
    %867 = vmatmul.f32.gmra.mxu0 %v756
    %v868 = vpop.f32.mrf.mxu0
    %v869 = vadd.f32 %v630, %v868
    %870 = vmatmul.f32.gmra.mxu0 %v759
    %v871 = vpop.f32.mrf.mxu0
    %v872 = vadd.f32 %v635, %v871
    %873 = vmatmul.f32.gmra.mxu0 %v762
    %v874 = vpop.f32.mrf.mxu0
    %v875 = vadd.f32 %v640, %v874
    %876 = vmatmul.f32.gmra.mxu0 %v765
    %v877 = vpop.f32.mrf.mxu0
    %v878 = vadd.f32 %v645, %v877
    %879 = vmatmul.f32.gmra.mxu0 %v768
    %v880 = vpop.f32.mrf.mxu0
    %v881 = vadd.f32 %v650, %v880
    %882 = vmatmul.f32.gmra.mxu0 %v771
    %v883 = vpop.f32.mrf.mxu0
    %v884 = vadd.f32 %v655, %v883
    %885 = vmatmul.f32.gmra.mxu0 %v774
    %v886 = vpop.f32.mrf.mxu0
    %v887 = vadd.f32 %v660, %v886
    %888 = vmatmul.f32.gmra.mxu0 %v777
    %v889 = vpop.f32.mrf.mxu0
    %v890 = vadd.f32 %v665, %v889
    %891 = vmatmul.f32.gmra.mxu0 %v780
    %v892 = vpop.f32.mrf.mxu0
    %v893 = vadd.f32 %v670, %v892
    %894 = vmatmul.f32.gmra.mxu0 %v783
    %v895 = vpop.f32.mrf.mxu0
    %v896 = vadd.f32 %v675, %v895
    %897 = vmatmul.f32.gmra.mxu0 %v786
    %v898 = vpop.f32.mrf.mxu0
    %v899 = vadd.f32 %v680, %v898
    %900 = vmatmul.f32.gmra.mxu0 %v789
    %v901 = vpop.f32.mrf.mxu0
    %v902 = vadd.f32 %v685, %v901
    %903 = vmatmul.f32.gmra.mxu0 %v792
    %v904 = vpop.f32.mrf.mxu0
    %v905 = vadd.f32 %v690, %v904
    %906 = vmatmul.f32.gmra.mxu0 %v795
    %v907 = vpop.f32.mrf.mxu0
    %v908 = vadd.f32 %v695, %v907
    %909 = vmatmul.f32.gmra.mxu0 %v798
    %v910 = vpop.f32.mrf.mxu0
    %v911 = vadd.f32 %v700, %v910
    %912 = vmatmul.f32.gmra.mxu0 %v801
    %v913 = vpop.f32.mrf.mxu0
    %v914 = vadd.f32 %v705, %v913
    %915 = vdwg.mxu0
    %v916 = vmax.f32 %v388, %v821
    %v917 = vmax.f32 %v391, %v824
    %v918 = vmax.f32 %v394, %v827
    %v919 = vmax.f32 %v397, %v830
    %v920 = vmax.f32 %v400, %v833
    %v921 = vmax.f32 %v403, %v836
    %v922 = vmax.f32 %v406, %v839
    %v923 = vmax.f32 %v409, %v842
    %v924 = vmax.f32 %v412, %v845
    %v925 = vmax.f32 %v415, %v848
    %v926 = vmax.f32 %v418, %v851
    %v927 = vmax.f32 %v421, %v854
    %v928 = vmax.f32 %v424, %v857
    %v929 = vmax.f32 %v427, %v860
    %v930 = vmax.f32 %v430, %v863
    %v931 = vmax.f32 %v433, %v866
    %v932 = vmax.f32 %v436, %v869
    %v933 = vmax.f32 %v439, %v872
    %v934 = vmax.f32 %v442, %v875
    %v935 = vmax.f32 %v445, %v878
    %v936 = vmax.f32 %v448, %v881
    %v937 = vmax.f32 %v451, %v884
    %v938 = vmax.f32 %v454, %v887
    %v939 = vmax.f32 %v457, %v890
    %v940 = vmax.f32 %v460, %v893
    %v941 = vmax.f32 %v463, %v896
    %v942 = vmax.f32 %v466, %v899
    %v943 = vmax.f32 %v469, %v902
    %v944 = vmax.f32 %v472, %v905
    %v945 = vmax.f32 %v475, %v908
    %v946 = vmax.f32 %v478, %v911
    %v947 = vmax.f32 %v481, %v914
    %vm948 = vcmp.gt.f32.partialorder %v916, 0.0
    %vm949 = vcmp.gt.f32.partialorder %v917, 0.0
    %vm950 = vcmp.gt.f32.partialorder %v918, 0.0
    %vm951 = vcmp.gt.f32.partialorder %v919, 0.0
    %vm952 = vcmp.gt.f32.partialorder %v920, 0.0
    %vm953 = vcmp.gt.f32.partialorder %v921, 0.0
    %vm954 = vcmp.gt.f32.partialorder %v922, 0.0
    %vm955 = vcmp.gt.f32.partialorder %v923, 0.0
    %vm956 = vcmp.gt.f32.partialorder %v924, 0.0
    %vm957 = vcmp.gt.f32.partialorder %v925, 0.0
    %vm958 = vcmp.gt.f32.partialorder %v926, 0.0
    %vm959 = vcmp.gt.f32.partialorder %v927, 0.0
    %vm960 = vcmp.gt.f32.partialorder %v928, 0.0
    %vm961 = vcmp.gt.f32.partialorder %v929, 0.0
    %vm962 = vcmp.gt.f32.partialorder %v930, 0.0
    %vm963 = vcmp.gt.f32.partialorder %v931, 0.0
    %vm964 = vcmp.gt.f32.partialorder %v932, 0.0
    %vm965 = vcmp.gt.f32.partialorder %v933, 0.0
    %vm966 = vcmp.gt.f32.partialorder %v934, 0.0
    %vm967 = vcmp.gt.f32.partialorder %v935, 0.0
    %vm968 = vcmp.gt.f32.partialorder %v936, 0.0
    %vm969 = vcmp.gt.f32.partialorder %v937, 0.0
    %vm970 = vcmp.gt.f32.partialorder %v938, 0.0
    %vm971 = vcmp.gt.f32.partialorder %v939, 0.0
    %vm972 = vcmp.gt.f32.partialorder %v940, 0.0
    %vm973 = vcmp.gt.f32.partialorder %v941, 0.0
    %vm974 = vcmp.gt.f32.partialorder %v942, 0.0
    %vm975 = vcmp.gt.f32.partialorder %v943, 0.0
    %vm976 = vcmp.gt.f32.partialorder %v944, 0.0
    %vm977 = vcmp.gt.f32.partialorder %v945, 0.0
    %vm978 = vcmp.gt.f32.partialorder %v946, 0.0
    %vm979 = vcmp.gt.f32.partialorder %v947, 0.0
    %v980 = vmul.f32 %v916, 0.01
    %v981 = vmul.f32 %v917, 0.01
    %v982 = vmul.f32 %v918, 0.01
    %v983 = vmul.f32 %v919, 0.01
    %v984 = vmul.f32 %v920, 0.01
    %v985 = vmul.f32 %v921, 0.01
    %v986 = vmul.f32 %v922, 0.01
    %v987 = vmul.f32 %v923, 0.01
    %v988 = vmul.f32 %v924, 0.01
    %v989 = vmul.f32 %v925, 0.01
    %v990 = vmul.f32 %v926, 0.01
    %v991 = vmul.f32 %v927, 0.01
    %v992 = vmul.f32 %v928, 0.01
    %v993 = vmul.f32 %v929, 0.01
    %v994 = vmul.f32 %v930, 0.01
    %v995 = vmul.f32 %v931, 0.01
    %v996 = vmul.f32 %v932, 0.01
    %v997 = vmul.f32 %v933, 0.01
    %v998 = vmul.f32 %v934, 0.01
    %v999 = vmul.f32 %v935, 0.01
    %v1000 = vmul.f32 %v936, 0.01
    %v1001 = vmul.f32 %v937, 0.01
    %v1002 = vmul.f32 %v938, 0.01
    %v1003 = vmul.f32 %v939, 0.01
    %v1004 = vmul.f32 %v940, 0.01
    %v1005 = vmul.f32 %v941, 0.01
    %v1006 = vmul.f32 %v942, 0.01
    %v1007 = vmul.f32 %v943, 0.01
    %v1008 = vmul.f32 %v944, 0.01
    %v1009 = vmul.f32 %v945, 0.01
    %v1010 = vmul.f32 %v946, 0.01
    %v1011 = vmul.f32 %v947, 0.01
    %v1012 = vsel %vm948, %v916, %v980
    %v1013 = vsel %vm949, %v917, %v981
    %v1014 = vsel %vm950, %v918, %v982
    %v1015 = vsel %vm951, %v919, %v983
    %v1016 = vsel %vm952, %v920, %v984
    %v1017 = vsel %vm953, %v921, %v985
    %v1018 = vsel %vm954, %v922, %v986
    %v1019 = vsel %vm955, %v923, %v987
    %v1020 = vsel %vm956, %v924, %v988
    %v1021 = vsel %vm957, %v925, %v989
    %v1022 = vsel %vm958, %v926, %v990
    %v1023 = vsel %vm959, %v927, %v991
    %v1024 = vsel %vm960, %v928, %v992
    %v1025 = vsel %vm961, %v929, %v993
    %v1026 = vsel %vm962, %v930, %v994
    %v1027 = vsel %vm963, %v931, %v995
    %v1028 = vsel %vm964, %v932, %v996
    %v1029 = vsel %vm965, %v933, %v997
    %v1030 = vsel %vm966, %v934, %v998
    %v1031 = vsel %vm967, %v935, %v999
    %v1032 = vsel %vm968, %v936, %v1000
    %v1033 = vsel %vm969, %v937, %v1001
    %v1034 = vsel %vm970, %v938, %v1002
    %v1035 = vsel %vm971, %v939, %v1003
    %v1036 = vsel %vm972, %v940, %v1004
    %v1037 = vsel %vm973, %v941, %v1005
    %v1038 = vsel %vm974, %v942, %v1006
    %v1039 = vsel %vm975, %v943, %v1007
    %v1040 = vsel %vm976, %v944, %v1008
    %v1041 = vsel %vm977, %v945, %v1009
    %v1042 = vsel %vm978, %v946, %v1010
    %v1043 = vsel %vm979, %v947, %v1011
    %v1044 = vld [vmem:[%s5] sm:$0xff]
    %v1045 = vld [vmem:[%s5 + $0x8] sm:$0xff]
    %v1046 = vld [vmem:[%s5 + $0x10] sm:$0xff]
    %v1047 = vld [vmem:[%s5 + $0x18] sm:$0xff]
    %v1048 = vld [vmem:[%s5 + $0x20] sm:$0xff]
    %v1049 = vld [vmem:[%s5 + $0x28] sm:$0xff]
    %v1050 = vld [vmem:[%s5 + $0x30] sm:$0xff]
    %v1051 = vld [vmem:[%s5 + $0x38] sm:$0xff]
    %v1052 = vld [vmem:[%s5 + $0x40] sm:$0xff]
    %v1053 = vld [vmem:[%s5 + $0x48] sm:$0xff]
    %v1054 = vld [vmem:[%s5 + $0x50] sm:$0xff]
    %v1055 = vld [vmem:[%s5 + $0x58] sm:$0xff]
    %v1056 = vld [vmem:[%s5 + $0x60] sm:$0xff]
    %v1057 = vld [vmem:[%s5 + $0x68] sm:$0xff]
    %v1058 = vld [vmem:[%s5 + $0x70] sm:$0xff]
    %v1059 = vld [vmem:[%s5 + $0x78] sm:$0xff]
    %v1060 = vld [vmem:[%s6] sm:$0xff]
    %v1061 = vld [vmem:[%s6 + $0x8] sm:$0xff]
    %v1062 = vld [vmem:[%s6 + $0x10] sm:$0xff]
    %v1063 = vld [vmem:[%s6 + $0x18] sm:$0xff]
    %v1064 = vld [vmem:[%s6 + $0x20] sm:$0xff]
    %v1065 = vld [vmem:[%s6 + $0x28] sm:$0xff]
    %v1066 = vld [vmem:[%s6 + $0x30] sm:$0xff]
    %v1067 = vld [vmem:[%s6 + $0x38] sm:$0xff]
    %1069 = vset.pattern.permute.xlu0 0
    %1070 = vperm.xlu0 %1069, %v1060
    %v1071 = vpop.permute.xlu0 %1070
    %1074 = vset.pattern.permute.xlu0 0
    %1075 = vperm.xlu0 %1074, %v1061
    %v1076 = vpop.permute.xlu0 %1075
    %1079 = vset.pattern.permute.xlu0 0
    %1080 = vperm.xlu0 %1079, %v1062
    %v1081 = vpop.permute.xlu0 %1080
    %1084 = vset.pattern.permute.xlu0 0
    %1085 = vperm.xlu0 %1084, %v1063
    %v1086 = vpop.permute.xlu0 %1085
    %1089 = vset.pattern.permute.xlu0 0
    %1090 = vperm.xlu0 %1089, %v1064
    %v1091 = vpop.permute.xlu0 %1090
    %1094 = vset.pattern.permute.xlu0 0
    %1095 = vperm.xlu0 %1094, %v1065
    %v1096 = vpop.permute.xlu0 %1095
    %1099 = vset.pattern.permute.xlu0 0
    %1100 = vperm.xlu0 %1099, %v1066
    %v1101 = vpop.permute.xlu0 %1100
    %1104 = vset.pattern.permute.xlu0 0
    %1105 = vperm.xlu0 %1104, %v1067
    %v1106 = vpop.permute.xlu0 %1105
    %1108 = vmatpush.msra.mxu0 %v1027
    %1109 = vmatpush.msra.mxu0 %v1026
    %1110 = vmatpush.msra.mxu0 %v1025
    %1111 = vmatpush.msra.mxu0 %v1024
    %1112 = vmatpush.msra.mxu0 %v1023
    %1113 = vmatpush.msra.mxu0 %v1022
    %1114 = vmatpush.msra.mxu0 %v1021
    %1115 = vmatpush.msra.mxu0 %v1020
    %1116 = vmatpush.msra.mxu0 %v1019
    %1117 = vmatpush.msra.mxu0 %v1018
    %1118 = vmatpush.msra.mxu0 %v1017
    %1119 = vmatpush.msra.mxu0 %v1016
    %1120 = vmatpush.msra.mxu0 %v1015
    %1121 = vmatpush.msra.mxu0 %v1014
    %1122 = vmatpush.msra.mxu0 %v1013
    %1123 = vmatpush.msra.mxu0 %v1012
    %1124 = vmatmul.f32.gmra.mxu0 %v1044
    %v1125 = vpop.f32.mrf.mxu0
    %v1126 = vadd.f32 %v1071, %v1125
    %1127 = vmatmul.f32.gmra.mxu0 %v1046
    %v1128 = vpop.f32.mrf.mxu0
    %v1129 = vadd.f32 %v1076, %v1128
    %1130 = vmatmul.f32.gmra.mxu0 %v1048
    %v1131 = vpop.f32.mrf.mxu0
    %v1132 = vadd.f32 %v1081, %v1131
    %1133 = vmatmul.f32.gmra.mxu0 %v1050
    %v1134 = vpop.f32.mrf.mxu0
    %v1135 = vadd.f32 %v1086, %v1134
    %1136 = vmatmul.f32.gmra.mxu0 %v1052
    %v1137 = vpop.f32.mrf.mxu0
    %v1138 = vadd.f32 %v1091, %v1137
    %1139 = vmatmul.f32.gmra.mxu0 %v1054
    %v1140 = vpop.f32.mrf.mxu0
    %v1141 = vadd.f32 %v1096, %v1140
    %1142 = vmatmul.f32.gmra.mxu0 %v1056
    %v1143 = vpop.f32.mrf.mxu0
    %v1144 = vadd.f32 %v1101, %v1143
    %1145 = vmatmul.f32.gmra.mxu0 %v1058
    %v1146 = vpop.f32.mrf.mxu0
    %v1147 = vadd.f32 %v1106, %v1146
    %1148 = vdwg.mxu0
    %1149 = vmatpush.msra.mxu0 %v1043
    %1150 = vmatpush.msra.mxu0 %v1042
    %1151 = vmatpush.msra.mxu0 %v1041
    %1152 = vmatpush.msra.mxu0 %v1040
    %1153 = vmatpush.msra.mxu0 %v1039
    %1154 = vmatpush.msra.mxu0 %v1038
    %1155 = vmatpush.msra.mxu0 %v1037
    %1156 = vmatpush.msra.mxu0 %v1036
    %1157 = vmatpush.msra.mxu0 %v1035
    %1158 = vmatpush.msra.mxu0 %v1034
    %1159 = vmatpush.msra.mxu0 %v1033
    %1160 = vmatpush.msra.mxu0 %v1032
    %1161 = vmatpush.msra.mxu0 %v1031
    %1162 = vmatpush.msra.mxu0 %v1030
    %1163 = vmatpush.msra.mxu0 %v1029
    %1164 = vmatpush.msra.mxu0 %v1028
    %1165 = vmatmul.f32.gmra.mxu0 %v1045
    %v1166 = vpop.f32.mrf.mxu0
    %v1167 = vadd.f32 %v1126, %v1166
    %1168 = vmatmul.f32.gmra.mxu0 %v1047
    %v1169 = vpop.f32.mrf.mxu0
    %v1170 = vadd.f32 %v1129, %v1169
    %1171 = vmatmul.f32.gmra.mxu0 %v1049
    %v1172 = vpop.f32.mrf.mxu0
    %v1173 = vadd.f32 %v1132, %v1172
    %1174 = vmatmul.f32.gmra.mxu0 %v1051
    %v1175 = vpop.f32.mrf.mxu0
    %v1176 = vadd.f32 %v1135, %v1175
    %1177 = vmatmul.f32.gmra.mxu0 %v1053
    %v1178 = vpop.f32.mrf.mxu0
    %v1179 = vadd.f32 %v1138, %v1178
    %1180 = vmatmul.f32.gmra.mxu0 %v1055
    %v1181 = vpop.f32.mrf.mxu0
    %v1182 = vadd.f32 %v1141, %v1181
    %1183 = vmatmul.f32.gmra.mxu0 %v1057
    %v1184 = vpop.f32.mrf.mxu0
    %v1185 = vadd.f32 %v1144, %v1184
    %1186 = vmatmul.f32.gmra.mxu0 %v1059
    %v1187 = vpop.f32.mrf.mxu0
    %v1188 = vadd.f32 %v1147, %v1187
    %1189 = vdwg.mxu0
    %v1190 = vld [vmem:[%s7] sm:$0xff]
    %v1191 = vld [vmem:[%s7 + $0x8] sm:$0xff]
    %v1192 = vld [vmem:[%s7 + $0x10] sm:$0xff]
    %v1193 = vld [vmem:[%s7 + $0x18] sm:$0xff]
    %v1194 = vld [vmem:[%s7 + $0x20] sm:$0xff]
    %v1195 = vld [vmem:[%s7 + $0x28] sm:$0xff]
    %v1196 = vld [vmem:[%s7 + $0x30] sm:$0xff]
    %v1197 = vld [vmem:[%s7 + $0x38] sm:$0xff]
    %v1198 = vld [vmem:[%s7 + $0x40] sm:$0xff]
    %v1199 = vld [vmem:[%s7 + $0x48] sm:$0xff]
    %v1200 = vld [vmem:[%s7 + $0x50] sm:$0xff]
    %v1201 = vld [vmem:[%s7 + $0x58] sm:$0xff]
    %v1202 = vld [vmem:[%s7 + $0x60] sm:$0xff]
    %v1203 = vld [vmem:[%s7 + $0x68] sm:$0xff]
    %v1204 = vld [vmem:[%s7 + $0x70] sm:$0xff]
    %v1205 = vld [vmem:[%s7 + $0x78] sm:$0xff]
    %v1206 = vld [vmem:[%s8] sm:$0xff]
    %v1207 = vld [vmem:[%s8 + $0x8] sm:$0xff]
    %v1208 = vld [vmem:[%s8 + $0x10] sm:$0xff]
    %v1209 = vld [vmem:[%s8 + $0x18] sm:$0xff]
    %v1210 = vld [vmem:[%s8 + $0x20] sm:$0xff]
    %v1211 = vld [vmem:[%s8 + $0x28] sm:$0xff]
    %v1212 = vld [vmem:[%s8 + $0x30] sm:$0xff]
    %v1213 = vld [vmem:[%s8 + $0x38] sm:$0xff]
    %1215 = vset.pattern.permute.xlu0 0
    %1216 = vperm.xlu0 %1215, %v1206
    %v1217 = vpop.permute.xlu0 %1216
    %1220 = vset.pattern.permute.xlu0 0
    %1221 = vperm.xlu0 %1220, %v1207
    %v1222 = vpop.permute.xlu0 %1221
    %1225 = vset.pattern.permute.xlu0 0
    %1226 = vperm.xlu0 %1225, %v1208
    %v1227 = vpop.permute.xlu0 %1226
    %1230 = vset.pattern.permute.xlu0 0
    %1231 = vperm.xlu0 %1230, %v1209
    %v1232 = vpop.permute.xlu0 %1231
    %1235 = vset.pattern.permute.xlu0 0
    %1236 = vperm.xlu0 %1235, %v1210
    %v1237 = vpop.permute.xlu0 %1236
    %1240 = vset.pattern.permute.xlu0 0
    %1241 = vperm.xlu0 %1240, %v1211
    %v1242 = vpop.permute.xlu0 %1241
    %1245 = vset.pattern.permute.xlu0 0
    %1246 = vperm.xlu0 %1245, %v1212
    %v1247 = vpop.permute.xlu0 %1246
    %1250 = vset.pattern.permute.xlu0 0
    %1251 = vperm.xlu0 %1250, %v1213
    %v1252 = vpop.permute.xlu0 %1251
    %1254 = vmatpush.msra.mxu0 %v1027
    %1255 = vmatpush.msra.mxu0 %v1026
    %1256 = vmatpush.msra.mxu0 %v1025
    %1257 = vmatpush.msra.mxu0 %v1024
    %1258 = vmatpush.msra.mxu0 %v1023
    %1259 = vmatpush.msra.mxu0 %v1022
    %1260 = vmatpush.msra.mxu0 %v1021
    %1261 = vmatpush.msra.mxu0 %v1020
    %1262 = vmatpush.msra.mxu0 %v1019
    %1263 = vmatpush.msra.mxu0 %v1018
    %1264 = vmatpush.msra.mxu0 %v1017
    %1265 = vmatpush.msra.mxu0 %v1016
    %1266 = vmatpush.msra.mxu0 %v1015
    %1267 = vmatpush.msra.mxu0 %v1014
    %1268 = vmatpush.msra.mxu0 %v1013
    %1269 = vmatpush.msra.mxu0 %v1012
    %1270 = vmatmul.f32.gmra.mxu0 %v1190
    %v1271 = vpop.f32.mrf.mxu0
    %v1272 = vadd.f32 %v1217, %v1271
    %1273 = vmatmul.f32.gmra.mxu0 %v1192
    %v1274 = vpop.f32.mrf.mxu0
    %v1275 = vadd.f32 %v1222, %v1274
    %1276 = vmatmul.f32.gmra.mxu0 %v1194
    %v1277 = vpop.f32.mrf.mxu0
    %v1278 = vadd.f32 %v1227, %v1277
    %1279 = vmatmul.f32.gmra.mxu0 %v1196
    %v1280 = vpop.f32.mrf.mxu0
    %v1281 = vadd.f32 %v1232, %v1280
    %1282 = vmatmul.f32.gmra.mxu0 %v1198
    %v1283 = vpop.f32.mrf.mxu0
    %v1284 = vadd.f32 %v1237, %v1283
    %1285 = vmatmul.f32.gmra.mxu0 %v1200
    %v1286 = vpop.f32.mrf.mxu0
    %v1287 = vadd.f32 %v1242, %v1286
    %1288 = vmatmul.f32.gmra.mxu0 %v1202
    %v1289 = vpop.f32.mrf.mxu0
    %v1290 = vadd.f32 %v1247, %v1289
    %1291 = vmatmul.f32.gmra.mxu0 %v1204
    %v1292 = vpop.f32.mrf.mxu0
    %v1293 = vadd.f32 %v1252, %v1292
    %1294 = vdwg.mxu0
    %1295 = vmatpush.msra.mxu0 %v1043
    %1296 = vmatpush.msra.mxu0 %v1042
    %1297 = vmatpush.msra.mxu0 %v1041
    %1298 = vmatpush.msra.mxu0 %v1040
    %1299 = vmatpush.msra.mxu0 %v1039
    %1300 = vmatpush.msra.mxu0 %v1038
    %1301 = vmatpush.msra.mxu0 %v1037
    %1302 = vmatpush.msra.mxu0 %v1036
    %1303 = vmatpush.msra.mxu0 %v1035
    %1304 = vmatpush.msra.mxu0 %v1034
    %1305 = vmatpush.msra.mxu0 %v1033
    %1306 = vmatpush.msra.mxu0 %v1032
    %1307 = vmatpush.msra.mxu0 %v1031
    %1308 = vmatpush.msra.mxu0 %v1030
    %1309 = vmatpush.msra.mxu0 %v1029
    %1310 = vmatpush.msra.mxu0 %v1028
    %1311 = vmatmul.f32.gmra.mxu0 %v1191
    %v1312 = vpop.f32.mrf.mxu0
    %v1313 = vadd.f32 %v1272, %v1312
    %1314 = vmatmul.f32.gmra.mxu0 %v1193
    %v1315 = vpop.f32.mrf.mxu0
    %v1316 = vadd.f32 %v1275, %v1315
    %1317 = vmatmul.f32.gmra.mxu0 %v1195
    %v1318 = vpop.f32.mrf.mxu0
    %v1319 = vadd.f32 %v1278, %v1318
    %1320 = vmatmul.f32.gmra.mxu0 %v1197
    %v1321 = vpop.f32.mrf.mxu0
    %v1322 = vadd.f32 %v1281, %v1321
    %1323 = vmatmul.f32.gmra.mxu0 %v1199
    %v1324 = vpop.f32.mrf.mxu0
    %v1325 = vadd.f32 %v1284, %v1324
    %1326 = vmatmul.f32.gmra.mxu0 %v1201
    %v1327 = vpop.f32.mrf.mxu0
    %v1328 = vadd.f32 %v1287, %v1327
    %1329 = vmatmul.f32.gmra.mxu0 %v1203
    %v1330 = vpop.f32.mrf.mxu0
    %v1331 = vadd.f32 %v1290, %v1330
    %1332 = vmatmul.f32.gmra.mxu0 %v1205
    %v1333 = vpop.f32.mrf.mxu0
    %v1334 = vadd.f32 %v1293, %v1333
    %1335 = vdwg.mxu0
    %v1336 = vmax.f32 %v1167, %v1313
    %v1337 = vmax.f32 %v1170, %v1316
    %v1338 = vmax.f32 %v1173, %v1319
    %v1339 = vmax.f32 %v1176, %v1322
    %v1340 = vmax.f32 %v1179, %v1325
    %v1341 = vmax.f32 %v1182, %v1328
    %v1342 = vmax.f32 %v1185, %v1331
    %v1343 = vmax.f32 %v1188, %v1334
    %vm1344 = vcmp.gt.f32.partialorder %v1336, 0.0
    %vm1345 = vcmp.gt.f32.partialorder %v1337, 0.0
    %vm1346 = vcmp.gt.f32.partialorder %v1338, 0.0
    %vm1347 = vcmp.gt.f32.partialorder %v1339, 0.0
    %vm1348 = vcmp.gt.f32.partialorder %v1340, 0.0
    %vm1349 = vcmp.gt.f32.partialorder %v1341, 0.0
    %vm1350 = vcmp.gt.f32.partialorder %v1342, 0.0
    %vm1351 = vcmp.gt.f32.partialorder %v1343, 0.0
    %v1352 = vmul.f32 %v1336, 0.01
    %v1353 = vmul.f32 %v1337, 0.01
    %v1354 = vmul.f32 %v1338, 0.01
    %v1355 = vmul.f32 %v1339, 0.01
    %v1356 = vmul.f32 %v1340, 0.01
    %v1357 = vmul.f32 %v1341, 0.01
    %v1358 = vmul.f32 %v1342, 0.01
    %v1359 = vmul.f32 %v1343, 0.01
    %v1360 = vsel %vm1344, %v1336, %v1352
    %v1361 = vsel %vm1345, %v1337, %v1353
    %v1362 = vsel %vm1346, %v1338, %v1354
    %v1363 = vsel %vm1347, %v1339, %v1355
    %v1364 = vsel %vm1348, %v1340, %v1356
    %v1365 = vsel %vm1349, %v1341, %v1357
    %v1366 = vsel %vm1350, %v1342, %v1358
    %v1367 = vsel %vm1351, %v1343, %v1359
    %v1368 = vld [vmem:[%s9] sm:$0xff]
    %v1369 = vld [vmem:[%s9 + $0x8] sm:$0xff]
    %v1370 = vld [vmem:[%s9 + $0x10] sm:$0xff]
    %v1371 = vld [vmem:[%s9 + $0x18] sm:$0xff]
    %v1372 = vld [vmem:[%s10] sm:$0xff]
    %v1373 = vld [vmem:[%s10 + $0x8] sm:$0xff]
    %v1374 = vld [vmem:[%s10 + $0x10] sm:$0xff]
    %v1375 = vld [vmem:[%s10 + $0x18] sm:$0xff]
    %1377 = vset.pattern.permute.xlu0 0
    %1378 = vperm.xlu0 %1377, %v1372
    %v1379 = vpop.permute.xlu0 %1378
    %1382 = vset.pattern.permute.xlu0 0
    %1383 = vperm.xlu0 %1382, %v1373
    %v1384 = vpop.permute.xlu0 %1383
    %1387 = vset.pattern.permute.xlu0 0
    %1388 = vperm.xlu0 %1387, %v1374
    %v1389 = vpop.permute.xlu0 %1388
    %1392 = vset.pattern.permute.xlu0 0
    %1393 = vperm.xlu0 %1392, %v1375
    %v1394 = vpop.permute.xlu0 %1393
    %vm1396 = vcmask 523264
    %v1398 = vsel %vm1396, %v1368, 0
    %v1401 = vsel %vm1396, %v1369, 0
    %v1404 = vsel %vm1396, %v1370, 0
    %v1407 = vsel %vm1396, %v1371, 0
    %1409 = vmatpush.msra.mxu0 0.0
    %1410 = vmatpush.msra.mxu0 0.0
    %1411 = vmatpush.msra.mxu0 0.0
    %1412 = vmatpush.msra.mxu0 0.0
    %1413 = vmatpush.msra.mxu0 0.0
    %1414 = vmatpush.msra.mxu0 0.0
    %1415 = vmatpush.msra.mxu0 0.0
    %1416 = vmatpush.msra.mxu0 0.0
    %1417 = vmatpush.msra.mxu0 %v1367
    %1418 = vmatpush.msra.mxu0 %v1366
    %1419 = vmatpush.msra.mxu0 %v1365
    %1420 = vmatpush.msra.mxu0 %v1364
    %1421 = vmatpush.msra.mxu0 %v1363
    %1422 = vmatpush.msra.mxu0 %v1362
    %1423 = vmatpush.msra.mxu0 %v1361
    %1424 = vmatpush.msra.mxu0 %v1360
    %1425 = vmatmul.f32.gmra.mxu0 %v1398
    %v1426 = vpop.f32.mrf.mxu0
    %v1427 = vadd.f32 %v1379, %v1426
    %1428 = vmatmul.f32.gmra.mxu0 %v1401
    %v1429 = vpop.f32.mrf.mxu0
    %v1430 = vadd.f32 %v1384, %v1429
    %1431 = vmatmul.f32.gmra.mxu0 %v1404
    %v1432 = vpop.f32.mrf.mxu0
    %v1433 = vadd.f32 %v1389, %v1432
    %1434 = vmatmul.f32.gmra.mxu0 %v1407
    %v1435 = vpop.f32.mrf.mxu0
    %v1436 = vadd.f32 %v1394, %v1435
    %1437 = vdwg.mxu0
    %vm1438 = vcmp.gt.f32.partialorder %v1427, 0.0
    %vm1439 = vcmp.gt.f32.partialorder %v1430, 0.0
    %vm1440 = vcmp.gt.f32.partialorder %v1433, 0.0
    %vm1441 = vcmp.gt.f32.partialorder %v1436, 0.0
    %v1442 = vmul.f32 %v1427, 0.01
    %v1443 = vmul.f32 %v1430, 0.01
    %v1444 = vmul.f32 %v1433, 0.01
    %v1445 = vmul.f32 %v1436, 0.01
    %v1446 = vsel %vm1438, %v1427, %v1442
    %v1447 = vsel %vm1439, %v1430, %v1443
    %v1448 = vsel %vm1440, %v1433, %v1444
    %v1449 = vsel %vm1441, %v1436, %v1445
    %v1450 = vld [vmem:[%s11] sm:$0xff]
    %v1451 = vld [vmem:[%s12] sm:$0xff]
    %1453 = vset.pattern.permute.xlu0 0
    %1454 = vperm.xlu0 %1453, %v1451
    %v1455 = vpop.permute.xlu0 %1454
    %v1458 = vsel %vm273, %v1450, 0
    %1460 = vmatpush.msra.mxu0 0.0
    %1461 = vmatpush.msra.mxu0 0.0
    %1462 = vmatpush.msra.mxu0 0.0
    %1463 = vmatpush.msra.mxu0 0.0
    %1464 = vmatpush.msra.mxu0 0.0
    %1465 = vmatpush.msra.mxu0 0.0
    %1466 = vmatpush.msra.mxu0 0.0
    %1467 = vmatpush.msra.mxu0 0.0
    %1468 = vmatpush.msra.mxu0 0.0
    %1469 = vmatpush.msra.mxu0 0.0
    %1470 = vmatpush.msra.mxu0 0.0
    %1471 = vmatpush.msra.mxu0 0.0
    %1472 = vmatpush.msra.mxu0 %v1449
    %1473 = vmatpush.msra.mxu0 %v1448
    %1474 = vmatpush.msra.mxu0 %v1447
    %1475 = vmatpush.msra.mxu0 %v1446
    %1476 = vmatmul.f32.gmra.mxu0 %v1458
    %v1477 = vpop.f32.mrf.mxu0
    %v1478 = vadd.f32 %v1455, %v1477
    %1479 = vdwg.mxu0
    %v1480 = vsub.f32 0.0, %v1478
    %v1481 = vmul.f32 %v1480, 1.442695
    %v1482 = vpow.pop %v1481
    %v1483 = vadd.f32 %v1482, 1.0
    %v1484 = vrcp.pop %v1483
    %vm1485 = vcmask 130048
    %1486 = vst.msk [vmem:[#allocation2] sm:$0xff] %vm1485, %v1484
    // Predicated region
    $region54: #{tpu_custom_call.1} parent=1 // pred_check
      _
    $region55: #{tpu_custom_call.1} parent=1 // pred_check_branch
      %1488 = sbr.rel (0) target = $region57
    $region56: #{tpu_custom_call.1} parent=1 // pred_region
      %1490 = vsyncadd [#allocation3], 0
      %s1492 = sshll.u32 [#allocation2], 4
      %s1493 = int_to_ptr.vmem [resolvable:$true] %s1492
      %s1494 = sshll.u32 %s13, 4
      %s1495 = int_to_ptr.hbm [resolvable:$true] %s1494
      %1497 = dma.vmem_to_hbm [thread:$0]  %s1493, 128, %s1495, [#allocation3]
    $region57: #{tpu_custom_call.1} parent=1 // pred_fallthru
      _
    // Predicated region
    $region58: #{tpu_custom_call.1} parent=1 // pred_check
      _
    $region59: #{tpu_custom_call.1} parent=1 // pred_check_branch
      %1499 = sbr.rel (0) target = $region61
    $region60: #{tpu_custom_call.1} parent=1 // pred_region
      %1501 = dma.done [#allocation3], 128
    $region61: #{tpu_custom_call.1} parent=1 // pred_fallthru
      _
    %1502 = vsyncpa [#allocation3], 1

</llo_original>
